<compile_context>
chip_gen: v6e
topology: v6e:2x2x1
jax: 0.10.0
libtpu: 0.0.40
codegen_flags: <defaults>
</compile_context>

<pallas_src>
import jax
import jax.numpy as jnp
from jax.experimental import pallas as pl
from jax.experimental.pallas import tpu as pltpu

# ----------------------------- model dims -----------------------------------
B = 2              # batch
N = 9              # vertices per molecule
F = 5              # node feature dim (MolGANEncoderLayer default nodes=5)
E = 5              # edge types (adjacency channel 0 is unused by the conv layers)
NEDGE = E - 1      # adjacency channels used by the conv layers
NBLK = NEDGE + 1   # lane blocks per conv layer: 4 edge blocks + 1 self-link block
U1, U2 = 128, 64   # graph-convolution units  (units[0] = (128, 64))
AGG = 64           # aggregation units        (units[1] = 64)
H1, H2 = 128, 64   # discriminator MLP head

LBLK = 128                     # lane block width (vreg lane count)
NAUG = 8                       # padded width of [node features | 1] : F + 1 -> 8
BN = B * N                     # 18
NP = ((BN + 7) // 8) * 8       # batch*nodes padded to a sublane multiple -> 24

# parameter-slab row offsets (all multiples of 8)
PR_W1 = 0                      # rows   0:8    conv-1 weights (contraction dim NAUG)
PR_W2 = PR_W1 + NAUG           # rows   8:144  conv-2 weights (U1 h-part rows + NAUG node rows)
PR_WA = PR_W2 + U1 + NAUG      # rows 144:280  aggregation weights
PR_HD = PR_WA + LBLK + NAUG    # rows 280:416  MLP head (128 weight rows + 8 bias rows)
PROWS = PR_HD + LBLK + NAUG    # 416
PCOLS = NBLK * LBLK            # 640
DROWS = NP + 8                 # 32  (NP activation rows + 8 seg-mask rows)
DCOLS = NBLK * LBLK            # 640 (4 adjacency blocks + node block)


# ----------------------------- Pallas kernel --------------------------------
def discriminator_kernel(data_ref, param_ref, out_ref):
    f32 = jnp.float32
    dot = lambda a, b: jnp.dot(a, b, preferred_element_type=f32)

    node_aug = data_ref[0:NP, NEDGE * LBLK:NEDGE * LBLK + NAUG]       # (NP, 8)  [node | 1 | 0 0]
    seg = data_ref[NP:NP + 8, 0:NP]                                    # (8, NP)  per-molecule row sum

    def conv(d_all):
        # d_all: (NP, NBLK*128); lane block k = annot @ W_k + b_k (zero-padded to 128 lanes).
        # Self-link block (k = NEDGE) has an identity adjacency -> added directly; each edge
        # block is multiplied by its per-edge batch-block-diagonal adjacency slab. All slices
        # are 128-lane / 8-sublane aligned; the edge dots are independent MXU pushes.
        acc = d_all[:, NEDGE * LBLK:NBLK * LBLK]
        for k in range(NEDGE):
            adj_k = data_ref[0:NP, k * LBLK:k * LBLK + NP]
            acc = acc + dot(adj_k, d_all[:, k * LBLK:(k + 1) * LBLK])
        return jnp.tanh(acc)

    # ---- MolGANConvolutionLayer #1 : F -> U1 ---------------------------------
    d1 = dot(node_aug, param_ref[PR_W1:PR_W1 + NAUG, :])               # (NP, 640)
    h1 = conv(d1)                                                      # (NP, 128)

    # ---- MolGANConvolutionLayer #2 : concat(h1, node) -> U2 ------------------
    d2 = (dot(h1, param_ref[PR_W2:PR_W2 + U1, :])
          + dot(node_aug, param_ref[PR_W2 + U1:PR_W2 + U1 + NAUG, :])) # (NP, 640), bias folded
    h2 = conv(d2)                                                      # (NP, 128), lanes >= U2 are 0

    # ---- MolGANAggregationLayer : concat(h2, node) -> AGG --------------------
    z = (dot(h2, param_ref[PR_WA:PR_WA + LBLK, 0:2 * LBLK])
         + dot(node_aug, param_ref[PR_WA + LBLK:PR_WA + LBLK + NAUG, 0:2 * LBLK]))
    ij = jax.nn.sigmoid(z[:, 0:LBLK]) * jnp.tanh(z[:, LBLK:2 * LBLK])  # (NP, 128)
    g = jnp.tanh(dot(seg, ij))                                         # (8, 128)

    # ---- Discriminator MLP head -----------------------------------------------
    w = lambda c: param_ref[PR_HD:PR_HD + LBLK, c * LBLK:(c + 1) * LBLK]
    bias = lambda c: param_ref[PR_HD + LBLK:PR_HD + LBLK + 1, c * LBLK:(c + 1) * LBLK]
    x = jnp.tanh(dot(g, w(0)) + bias(0))
    x = jnp.tanh(dot(x, w(1)) + bias(1))
    out_ref[...] = dot(x, w(2)) + bias(2)                              # single lane-dense (8,128) store


# ----------------------------- wrapper-side packing --------------------------
def pack_inputs(adjacency, node, p):
    """Pure-JAX preprocessing: build 2 lane-dense slabs (2 input DMAs).

    data slab  (32, 640): per-edge block-diag adjacency at lanes k*128, node features +
                          bias-ones at lanes 512:520, segment-sum mask at rows 24:32.
    param slab (416, 640): conv-1, conv-2, aggregation and head weights; every block is
                          zero-padded so real columns start at 128-lane boundaries.
    """
    f32 = jnp.float32

    # -------- data slab --------
    data = jnp.zeros((DROWS, DCOLS), f32)
    for k in range(NEDGE):                                   # adjacency channel k+1
        blk = jnp.zeros((NP, NP), f32)
        for b in range(B):
            blk = blk.at[b * N:(b + 1) * N, b * N:(b + 1) * N].set(adjacency[b, k + 1])
        data = data.at[0:NP, k * LBLK:k * LBLK + NP].set(blk)
    node_aug = jnp.zeros((NP, NAUG), f32)
    node_aug = node_aug.at[0:BN, 0:F].set(node.reshape(BN, F))
    node_aug = node_aug.at[0:BN, F].set(1.0)                 # ones column (bias fold)
    data = data.at[0:NP, NEDGE * LBLK:NEDGE * LBLK + NAUG].set(node_aug)
    seg = jnp.zeros((8, NP), f32)                            # precomputed segment-sum mask
    for b in range(B):
        seg = seg.at[b, b * N:(b + 1) * N].set(1.0)
    data = data.at[NP:NP + 8, 0:NP].set(seg)

    # -------- parameter slab --------
    ps = jnp.zeros((PROWS, PCOLS), f32)

    # conv layer 1: lane block k <- [c1w1[k]; c1b1[k]]  (U1 = 128 lanes, already aligned)
    for k in range(NEDGE):
        ps = ps.at[PR_W1:PR_W1 + F, k * LBLK:k * LBLK + U1].set(p['c1w1'][k])
        ps = ps.at[PR_W1 + F, k * LBLK:k * LBLK + U1].set(p['c1b1'][k][0])
    ps = ps.at[PR_W1:PR_W1 + F, NEDGE * LBLK:NEDGE * LBLK + U1].set(p['c1w2'])
    ps = ps.at[PR_W1 + F, NEDGE * LBLK:NEDGE * LBLK + U1].set(p['c1b2'][0])

    # conv layer 2: lane block k uses lanes [k*128, k*128+64); h-part rows then node rows.
    def put_conv2(ps, k, wmat, bvec):
        c0 = k * LBLK
        ps = ps.at[PR_W2:PR_W2 + U1, c0:c0 + U2].set(wmat[:U1])
        ps = ps.at[PR_W2 + U1:PR_W2 + U1 + F, c0:c0 + U2].set(wmat[U1:])
        ps = ps.at[PR_W2 + U1 + F, c0:c0 + U2].set(bvec[0])
        return ps
    for k in range(NEDGE):
        ps = put_conv2(ps, k, p['c2w1'][k], p['c2b1'][k])
    ps = put_conv2(ps, NEDGE, p['c2w2'], p['c2b2'])

    # aggregation: i-gate at lanes 0:128, j-gate at lanes 128:256 (real width AGG = 64)
    for gi, (wmat, bvec) in enumerate(((p['a1'], p['a1b']), (p['a2'], p['a2b']))):
        c0 = gi * LBLK
        ps = ps.at[PR_WA:PR_WA + U2, c0:c0 + AGG].set(wmat[:U2])
        ps = ps.at[PR_WA + LBLK:PR_WA + LBLK + F, c0:c0 + AGG].set(wmat[U2:])
        ps = ps.at[PR_WA + LBLK + F, c0:c0 + AGG].set(bvec[0])

    # MLP head: dense1 / dense2 / dense3 at lane blocks 0 / 1 / 2; biases at row PR_HD+128.
    hb = PR_HD + LBLK
    ps = ps.at[PR_HD:PR_HD + AGG, 0:H1].set(p['d1w'])
    ps = ps.at[hb, 0:H1].set(p['d1b'][0])
    ps = ps.at[PR_HD:PR_HD + H1, LBLK:LBLK + H2].set(p['d2w'])
    ps = ps.at[hb, LBLK:LBLK + H2].set(p['d2b'][0])
    ps = ps.at[PR_HD:PR_HD + H2, 2 * LBLK:2 * LBLK + 1].set(p['d3w'])
    ps = ps.at[hb, 2 * LBLK:2 * LBLK + 1].set(p['d3b'][0])

    return data, ps


def discriminator_forward(adjacency, node, params):
    data, pslab = pack_inputs(adjacency, node, params)
    vmem = pl.BlockSpec(memory_space=pltpu.MemorySpace.VMEM)
    out_full = pl.pallas_call(
        discriminator_kernel,
        out_shape=jax.ShapeDtypeStruct((8, LBLK), jnp.float32),   # lane-dense padded output
        in_specs=[vmem, vmem],
        out_specs=vmem,
    )(data, pslab)
    return out_full[:B, :1]


# ----------------------------- parameter init --------------------------------
def init_params(key):
    def nrm(k, shape, scale=0.1):
        return scale * jax.random.normal(k, shape, dtype=jnp.float32)

    ks = iter(jax.random.split(key, 24))
    p = {}
    # conv layer 1 : Linear(F, U1) x (E-1), Linear(F, U1)
    p['c1w1'] = nrm(next(ks), (E - 1, F, U1))
    p['c1b1'] = nrm(next(ks), (E - 1, 1, U1))
    p['c1w2'] = nrm(next(ks), (F, U1))
    p['c1b2'] = nrm(next(ks), (1, U1))
    # conv layer 2 : Linear(U1 + F, U2) x (E-1), Linear(U1 + F, U2)
    p['c2w1'] = nrm(next(ks), (E - 1, U1 + F, U2))
    p['c2b1'] = nrm(next(ks), (E - 1, 1, U2))
    p['c2w2'] = nrm(next(ks), (U1 + F, U2))
    p['c2b2'] = nrm(next(ks), (1, U2))
    # aggregation : Linear(U2 + F, AGG) x 2
    p['a1'] = nrm(next(ks), (U2 + F, AGG))
    p['a1b'] = nrm(next(ks), (1, AGG))
    p['a2'] = nrm(next(ks), (U2 + F, AGG))
    p['a2b'] = nrm(next(ks), (1, AGG))
    # MLP head : Linear(64,128), Linear(128,64), Linear(64,1)
    p['d1w'] = nrm(next(ks), (AGG, H1))
    p['d1b'] = nrm(next(ks), (1, H1))
    p['d2w'] = nrm(next(ks), (H1, H2))
    p['d2b'] = nrm(next(ks), (1, H2))
    p['d3w'] = nrm(next(ks), (H2, 1))
    p['d3b'] = nrm(next(ks), (1, 1))
    return p


# ----------------------------- pure-JAX reference ----------------------------
def reference_forward(adj, node, p):
    adj_e = adj[:, 1:, :, :]

    def conv(annot, w1, b1, w2, b2):
        od = jnp.einsum('bnf,efu->benu', annot, w1) + b1[None]
        om = jnp.einsum('benm,bemu->benu', adj_e, od)
        return jnp.tanh(om.sum(1) + jnp.einsum('bnf,fu->bnu', annot, w2) + b2[None])

    h1 = conv(node, p['c1w1'], p['c1b1'], p['c1w2'], p['c1b2'])
    annot2 = jnp.concatenate([h1, node], -1)
    h2 = conv(annot2, p['c2w1'], p['c2b1'], p['c2w2'], p['c2b2'])
    annot3 = jnp.concatenate([h2, node], -1)
    i = jax.nn.sigmoid(jnp.einsum('bnf,fu->bnu', annot3, p['a1']) + p['a1b'][None])
    j = jnp.tanh(jnp.einsum('bnf,fu->bnu', annot3, p['a2']) + p['a2b'][None])
    g = jnp.tanh((i * j).sum(1))
    x = jnp.tanh(g @ p['d1w'] + p['d1b'])
    x = jnp.tanh(x @ p['d2w'] + p['d2b'])
    return x @ p['d3w'] + p['d3b']


# ----------------------------- main ------------------------------------------
if __name__ == "__main__":
    key = jax.random.PRNGKey(0)
    k_adj, k_node, k_params = jax.random.split(key, 3)

    # soft adjacency over edge types (like generator output) and node features
    adjacency = jax.nn.softmax(
        jax.random.normal(k_adj, (B, E, N, N), dtype=jnp.float32), axis=1)
    node = jax.nn.softmax(
        jax.random.normal(k_node, (B, N, F), dtype=jnp.float32), axis=-1)

    params = init_params(k_params)

    fwd = jax.jit(discriminator_forward)
    out = jax.block_until_ready(fwd(adjacency, node, params))

    ref = reference_forward(adjacency, node, params)
    assert out.shape == (B, 1)
    assert jnp.allclose(out, ref, atol=1e-4, rtol=1e-4), (out, ref)

    print("KERNEL_OK")
</pallas_src>

<mosaic_0001>
module attributes {stable_mosaic.version = 11 : i64} {
  func.func @discriminator_kernel(%arg0: memref<32x640xf32, #tpu.memory_space<vmem>>, %arg1: memref<416x640xf32, #tpu.memory_space<vmem>>, %arg2: memref<8x128xf32, #tpu.memory_space<vmem>>) attributes {dimension_semantics = [], scalar_prefetch = 0 : i64, scratch_operands = 0 : i64, tpu.core_type = #tpu.core_type<tc>} {
    %c0 = arith.constant 0 : index
    %c512 = arith.constant 512 : index
    %0 = vector.load %arg0[%c0, %c512] : memref<32x640xf32, #tpu.memory_space<vmem>>, vector<24x8xf32>
    %c24 = arith.constant 24 : index
    %c0_0 = arith.constant 0 : index
    %1 = vector.load %arg0[%c24, %c0_0] : memref<32x640xf32, #tpu.memory_space<vmem>>, vector<8x24xf32>
    %c0_1 = arith.constant 0 : index
    %c0_2 = arith.constant 0 : index
    %2 = vector.load %arg1[%c0_1, %c0_2] : memref<416x640xf32, #tpu.memory_space<vmem>>, vector<8x640xf32>
    %cst = arith.constant dense<0.000000e+00> : vector<24x640xf32>
    %3 = tpu.matmul %0, %2, %cst {dimension_numbers = #tpu.dot_dimension_numbers<[1], [0], [0], [1], [0, 0, 1, 1], [], []>} : vector<24x8xf32>, vector<8x640xf32>, vector<24x640xf32> -> vector<24x640xf32>
    %4 = vector.extract_strided_slice %3 {offsets = [0, 512], sizes = [24, 128], strides = [1, 1]} : vector<24x640xf32> to vector<24x128xf32>
    %c0_3 = arith.constant 0 : index
    %c0_4 = arith.constant 0 : index
    %5 = vector.load %arg0[%c0_3, %c0_4] : memref<32x640xf32, #tpu.memory_space<vmem>>, vector<24x24xf32>
    %6 = vector.extract_strided_slice %3 {offsets = [0, 0], sizes = [24, 128], strides = [1, 1]} : vector<24x640xf32> to vector<24x128xf32>
    %cst_5 = arith.constant dense<0.000000e+00> : vector<24x128xf32>
    %7 = tpu.matmul %5, %6, %cst_5 {dimension_numbers = #tpu.dot_dimension_numbers<[1], [0], [0], [1], [0, 0, 1, 1], [], []>} : vector<24x24xf32>, vector<24x128xf32>, vector<24x128xf32> -> vector<24x128xf32>
    %8 = arith.addf %4, %7 : vector<24x128xf32>
    %c0_6 = arith.constant 0 : index
    %c128 = arith.constant 128 : index
    %9 = vector.load %arg0[%c0_6, %c128] : memref<32x640xf32, #tpu.memory_space<vmem>>, vector<24x24xf32>
    %10 = vector.extract_strided_slice %3 {offsets = [0, 128], sizes = [24, 128], strides = [1, 1]} : vector<24x640xf32> to vector<24x128xf32>
    %cst_7 = arith.constant dense<0.000000e+00> : vector<24x128xf32>
    %11 = tpu.matmul %9, %10, %cst_7 {dimension_numbers = #tpu.dot_dimension_numbers<[1], [0], [0], [1], [0, 0, 1, 1], [], []>} : vector<24x24xf32>, vector<24x128xf32>, vector<24x128xf32> -> vector<24x128xf32>
    %12 = arith.addf %8, %11 : vector<24x128xf32>
    %c0_8 = arith.constant 0 : index
    %c256 = arith.constant 256 : index
    %13 = vector.load %arg0[%c0_8, %c256] : memref<32x640xf32, #tpu.memory_space<vmem>>, vector<24x24xf32>
    %14 = vector.extract_strided_slice %3 {offsets = [0, 256], sizes = [24, 128], strides = [1, 1]} : vector<24x640xf32> to vector<24x128xf32>
    %cst_9 = arith.constant dense<0.000000e+00> : vector<24x128xf32>
    %15 = tpu.matmul %13, %14, %cst_9 {dimension_numbers = #tpu.dot_dimension_numbers<[1], [0], [0], [1], [0, 0, 1, 1], [], []>} : vector<24x24xf32>, vector<24x128xf32>, vector<24x128xf32> -> vector<24x128xf32>
    %16 = arith.addf %12, %15 : vector<24x128xf32>
    %c0_10 = arith.constant 0 : index
    %c384 = arith.constant 384 : index
    %17 = vector.load %arg0[%c0_10, %c384] : memref<32x640xf32, #tpu.memory_space<vmem>>, vector<24x24xf32>
    %18 = vector.extract_strided_slice %3 {offsets = [0, 384], sizes = [24, 128], strides = [1, 1]} : vector<24x640xf32> to vector<24x128xf32>
    %cst_11 = arith.constant dense<0.000000e+00> : vector<24x128xf32>
    %19 = tpu.matmul %17, %18, %cst_11 {dimension_numbers = #tpu.dot_dimension_numbers<[1], [0], [0], [1], [0, 0, 1, 1], [], []>} : vector<24x24xf32>, vector<24x128xf32>, vector<24x128xf32> -> vector<24x128xf32>
    %20 = arith.addf %16, %19 : vector<24x128xf32>
    %21 = math.tanh %20 : vector<24x128xf32>
    %c8 = arith.constant 8 : index
    %c0_12 = arith.constant 0 : index
    %22 = vector.load %arg1[%c8, %c0_12] : memref<416x640xf32, #tpu.memory_space<vmem>>, vector<128x640xf32>
    %cst_13 = arith.constant dense<0.000000e+00> : vector<24x640xf32>
    %23 = tpu.matmul %21, %22, %cst_13 {dimension_numbers = #tpu.dot_dimension_numbers<[1], [0], [0], [1], [0, 0, 1, 1], [], []>} : vector<24x128xf32>, vector<128x640xf32>, vector<24x640xf32> -> vector<24x640xf32>
    %c136 = arith.constant 136 : index
    %c0_14 = arith.constant 0 : index
    %24 = vector.load %arg1[%c136, %c0_14] : memref<416x640xf32, #tpu.memory_space<vmem>>, vector<8x640xf32>
    %cst_15 = arith.constant dense<0.000000e+00> : vector<24x640xf32>
    %25 = tpu.matmul %0, %24, %cst_15 {dimension_numbers = #tpu.dot_dimension_numbers<[1], [0], [0], [1], [0, 0, 1, 1], [], []>} : vector<24x8xf32>, vector<8x640xf32>, vector<24x640xf32> -> vector<24x640xf32>
    %26 = arith.addf %23, %25 : vector<24x640xf32>
    %27 = vector.extract_strided_slice %26 {offsets = [0, 512], sizes = [24, 128], strides = [1, 1]} : vector<24x640xf32> to vector<24x128xf32>
    %c0_16 = arith.constant 0 : index
    %c0_17 = arith.constant 0 : index
    %28 = vector.load %arg0[%c0_16, %c0_17] : memref<32x640xf32, #tpu.memory_space<vmem>>, vector<24x24xf32>
    %29 = vector.extract_strided_slice %26 {offsets = [0, 0], sizes = [24, 128], strides = [1, 1]} : vector<24x640xf32> to vector<24x128xf32>
    %cst_18 = arith.constant dense<0.000000e+00> : vector<24x128xf32>
    %30 = tpu.matmul %28, %29, %cst_18 {dimension_numbers = #tpu.dot_dimension_numbers<[1], [0], [0], [1], [0, 0, 1, 1], [], []>} : vector<24x24xf32>, vector<24x128xf32>, vector<24x128xf32> -> vector<24x128xf32>
    %31 = arith.addf %27, %30 : vector<24x128xf32>
    %c0_19 = arith.constant 0 : index
    %c128_20 = arith.constant 128 : index
    %32 = vector.load %arg0[%c0_19, %c128_20] : memref<32x640xf32, #tpu.memory_space<vmem>>, vector<24x24xf32>
    %33 = vector.extract_strided_slice %26 {offsets = [0, 128], sizes = [24, 128], strides = [1, 1]} : vector<24x640xf32> to vector<24x128xf32>
    %cst_21 = arith.constant dense<0.000000e+00> : vector<24x128xf32>
    %34 = tpu.matmul %32, %33, %cst_21 {dimension_numbers = #tpu.dot_dimension_numbers<[1], [0], [0], [1], [0, 0, 1, 1], [], []>} : vector<24x24xf32>, vector<24x128xf32>, vector<24x128xf32> -> vector<24x128xf32>
    %35 = arith.addf %31, %34 : vector<24x128xf32>
    %c0_22 = arith.constant 0 : index
    %c256_23 = arith.constant 256 : index
    %36 = vector.load %arg0[%c0_22, %c256_23] : memref<32x640xf32, #tpu.memory_space<vmem>>, vector<24x24xf32>
    %37 = vector.extract_strided_slice %26 {offsets = [0, 256], sizes = [24, 128], strides = [1, 1]} : vector<24x640xf32> to vector<24x128xf32>
    %cst_24 = arith.constant dense<0.000000e+00> : vector<24x128xf32>
    %38 = tpu.matmul %36, %37, %cst_24 {dimension_numbers = #tpu.dot_dimension_numbers<[1], [0], [0], [1], [0, 0, 1, 1], [], []>} : vector<24x24xf32>, vector<24x128xf32>, vector<24x128xf32> -> vector<24x128xf32>
    %39 = arith.addf %35, %38 : vector<24x128xf32>
    %c0_25 = arith.constant 0 : index
    %c384_26 = arith.constant 384 : index
    %40 = vector.load %arg0[%c0_25, %c384_26] : memref<32x640xf32, #tpu.memory_space<vmem>>, vector<24x24xf32>
    %41 = vector.extract_strided_slice %26 {offsets = [0, 384], sizes = [24, 128], strides = [1, 1]} : vector<24x640xf32> to vector<24x128xf32>
    %cst_27 = arith.constant dense<0.000000e+00> : vector<24x128xf32>
    %42 = tpu.matmul %40, %41, %cst_27 {dimension_numbers = #tpu.dot_dimension_numbers<[1], [0], [0], [1], [0, 0, 1, 1], [], []>} : vector<24x24xf32>, vector<24x128xf32>, vector<24x128xf32> -> vector<24x128xf32>
    %43 = arith.addf %39, %42 : vector<24x128xf32>
    %44 = math.tanh %43 : vector<24x128xf32>
    %c144 = arith.constant 144 : index
    %c0_28 = arith.constant 0 : index
    %45 = vector.load %arg1[%c144, %c0_28] : memref<416x640xf32, #tpu.memory_space<vmem>>, vector<128x256xf32>
    %cst_29 = arith.constant dense<0.000000e+00> : vector<24x256xf32>
    %46 = tpu.matmul %44, %45, %cst_29 {dimension_numbers = #tpu.dot_dimension_numbers<[1], [0], [0], [1], [0, 0, 1, 1], [], []>} : vector<24x128xf32>, vector<128x256xf32>, vector<24x256xf32> -> vector<24x256xf32>
    %c272 = arith.constant 272 : index
    %c0_30 = arith.constant 0 : index
    %47 = vector.load %arg1[%c272, %c0_30] : memref<416x640xf32, #tpu.memory_space<vmem>>, vector<8x256xf32>
    %cst_31 = arith.constant dense<0.000000e+00> : vector<24x256xf32>
    %48 = tpu.matmul %0, %47, %cst_31 {dimension_numbers = #tpu.dot_dimension_numbers<[1], [0], [0], [1], [0, 0, 1, 1], [], []>} : vector<24x8xf32>, vector<8x256xf32>, vector<24x256xf32> -> vector<24x256xf32>
    %49 = arith.addf %46, %48 : vector<24x256xf32>
    %50 = vector.extract_strided_slice %49 {offsets = [0, 0], sizes = [24, 128], strides = [1, 1]} : vector<24x256xf32> to vector<24x128xf32>
    %51 = arith.negf %50 : vector<24x128xf32>
    %52 = math.exp %51 : vector<24x128xf32>
    %cst_32 = arith.constant 1.000000e+00 : f32
    %53 = vector.broadcast %cst_32 : f32 to vector<24x128xf32>
    %54 = arith.addf %53, %52 : vector<24x128xf32>
    %55 = arith.divf %53, %54 : vector<24x128xf32>
    %56 = vector.extract_strided_slice %49 {offsets = [0, 128], sizes = [24, 128], strides = [1, 1]} : vector<24x256xf32> to vector<24x128xf32>
    %57 = math.tanh %56 : vector<24x128xf32>
    %58 = arith.mulf %55, %57 : vector<24x128xf32>
    %cst_33 = arith.constant dense<0.000000e+00> : vector<8x128xf32>
    %59 = tpu.matmul %1, %58, %cst_33 {dimension_numbers = #tpu.dot_dimension_numbers<[1], [0], [0], [1], [0, 0, 1, 1], [], []>} : vector<8x24xf32>, vector<24x128xf32>, vector<8x128xf32> -> vector<8x128xf32>
    %60 = math.tanh %59 : vector<8x128xf32>
    %c280 = arith.constant 280 : index
    %c0_34 = arith.constant 0 : index
    %61 = vector.load %arg1[%c280, %c0_34] : memref<416x640xf32, #tpu.memory_space<vmem>>, vector<128x128xf32>
    %cst_35 = arith.constant dense<0.000000e+00> : vector<8x128xf32>
    %62 = tpu.matmul %60, %61, %cst_35 {dimension_numbers = #tpu.dot_dimension_numbers<[1], [0], [0], [1], [0, 0, 1, 1], [], []>} : vector<8x128xf32>, vector<128x128xf32>, vector<8x128xf32> -> vector<8x128xf32>
    %c408 = arith.constant 408 : index
    %c0_36 = arith.constant 0 : index
    %63 = vector.load %arg1[%c408, %c0_36] : memref<416x640xf32, #tpu.memory_space<vmem>>, vector<1x128xf32>
    %64 = vector.broadcast %63 : vector<1x128xf32> to vector<8x128xf32>
    %65 = arith.addf %62, %64 : vector<8x128xf32>
    %66 = math.tanh %65 : vector<8x128xf32>
    %c280_37 = arith.constant 280 : index
    %c128_38 = arith.constant 128 : index
    %67 = vector.load %arg1[%c280_37, %c128_38] : memref<416x640xf32, #tpu.memory_space<vmem>>, vector<128x128xf32>
    %cst_39 = arith.constant dense<0.000000e+00> : vector<8x128xf32>
    %68 = tpu.matmul %66, %67, %cst_39 {dimension_numbers = #tpu.dot_dimension_numbers<[1], [0], [0], [1], [0, 0, 1, 1], [], []>} : vector<8x128xf32>, vector<128x128xf32>, vector<8x128xf32> -> vector<8x128xf32>
    %c408_40 = arith.constant 408 : index
    %c128_41 = arith.constant 128 : index
    %69 = vector.load %arg1[%c408_40, %c128_41] : memref<416x640xf32, #tpu.memory_space<vmem>>, vector<1x128xf32>
    %70 = vector.broadcast %69 : vector<1x128xf32> to vector<8x128xf32>
    %71 = arith.addf %68, %70 : vector<8x128xf32>
    %72 = math.tanh %71 : vector<8x128xf32>
    %c280_42 = arith.constant 280 : index
    %c256_43 = arith.constant 256 : index
    %73 = vector.load %arg1[%c280_42, %c256_43] : memref<416x640xf32, #tpu.memory_space<vmem>>, vector<128x128xf32>
    %cst_44 = arith.constant dense<0.000000e+00> : vector<8x128xf32>
    %74 = tpu.matmul %72, %73, %cst_44 {dimension_numbers = #tpu.dot_dimension_numbers<[1], [0], [0], [1], [0, 0, 1, 1], [], []>} : vector<8x128xf32>, vector<128x128xf32>, vector<8x128xf32> -> vector<8x128xf32>
    %c408_45 = arith.constant 408 : index
    %c256_46 = arith.constant 256 : index
    %75 = vector.load %arg1[%c408_45, %c256_46] : memref<416x640xf32, #tpu.memory_space<vmem>>, vector<1x128xf32>
    %76 = vector.broadcast %75 : vector<1x128xf32> to vector<8x128xf32>
    %77 = arith.addf %74, %76 : vector<8x128xf32>
    %c0_47 = arith.constant 0 : index
    %c0_48 = arith.constant 0 : index
    %78 = vector.load %arg2[%c0_47, %c0_48] : memref<8x128xf32, #tpu.memory_space<vmem>>, vector<8x128xf32>
    tpu.vector_store %arg2[%c0_47, %c0_48], %77 {strides = array<i32>} : memref<8x128xf32, #tpu.memory_space<vmem>>, vector<8x128xf32>,
    return
  }
}

</mosaic_0001>

<llo_original>
// kernel: discriminator_forward.1
$region0: #{discriminator_forward.1}
  #allocation0 [shape = 'u32[]', space=smem, size = 0x4, offset = 0x4, fixed_abs, tag = 'smem constant byte address 0x4 - core index']
  #allocation1 [shape = 'u32[144,128]{1,0:T(1,128)}', space=vmem, size = 0x12000, scoped, tag = 'internal scratch']
  %s0 = inlined_call_operand.vmem [shape: f32[32,640], index: 0, kind: input, shape index: {}]
  %s1 = inlined_call_operand.vmem [shape: f32[416,640], index: 1, kind: input, shape index: {}]
  %s2 = inlined_call_operand.vmem [shape: f32[8,128], index: 2, kind: output, shape index: {}]
  %s3 = sld [smem:[#allocation0]]
  $region18: #{discriminator_forward.1} parent=0
    _
  %s5 = ssub.s32 1, %s3
  %s6 = scalar_select 0, %s5, %s3
  // Predicated region
  $region2: #{discriminator_forward.1} parent=0 // pred_check
    _
  $region3: #{discriminator_forward.1} parent=0 // pred_check_branch
    %8 = sbr.rel (0) target = $region5
  $region4: #{discriminator_forward.1} parent=0 // pred_region
    _
  $region5: #{discriminator_forward.1} parent=0 // pred_fallthru
    _
  // Predicated region
  $region6: #{discriminator_forward.1} parent=0 // pred_check
    _
  $region7: #{discriminator_forward.1} parent=0 // pred_check_branch
    %10 = sbr.rel (0) target = $region9
  $region8: #{discriminator_forward.1} parent=0 // pred_region
    _
  $region9: #{discriminator_forward.1} parent=0 // pred_fallthru
    _
  %v11 = vld [vmem:[%s0 + $0x20] sm:$0xff]
  %v12 = vld [vmem:[%s0 + $0x48] sm:$0xff]
  %v13 = vld [vmem:[%s0 + $0x70] sm:$0xff]
  %v14 = vld [vmem:[%s0 + $0x78] sm:$0xff]
  %v15 = vld [vmem:[%s1] sm:$0xff]
  %v16 = vld [vmem:[%s1 + $0x8] sm:$0xff]
  %v17 = vld [vmem:[%s1 + $0x10] sm:$0xff]
  %v18 = vld [vmem:[%s1 + $0x18] sm:$0xff]
  %v19 = vld [vmem:[%s1 + $0x20] sm:$0xff]
  %vm20 = vcmask 64512
  %v22 = vsel %vm20, %v11, 0
  %v25 = vsel %vm20, %v12, 0
  %v28 = vsel %vm20, %v13, 0
  %30 = vmatprep.subr.mxu0 0.0
  %31 = vmatpush1.msra.mxu0 0.0
  %32 = vmatprep.subr.mxu0 0.0
  %33 = vmatpush1.msra.mxu0 0.0
  %34 = vmatprep.subr.mxu0 0.0
  %35 = vmatpush1.msra.mxu0 0.0
  %36 = vmatprep.subr.mxu0 0.0
  %37 = vmatpush1.msra.mxu0 0.0
  %38 = vmatprep.subr.mxu0 0.0
  %39 = vmatpush1.msra.mxu0 0.0
  %40 = vmatprep.subr.mxu0 0.0
  %41 = vmatpush1.msra.mxu0 0.0
  %42 = vmatprep.subr.mxu0 0.0
  %43 = vmatpush1.msra.mxu0 0.0
  %44 = vmatprep.subr.mxu0 0.0
  %45 = vmatpush1.msra.mxu0 0.0
  %46 = vmatprep.subr.mxu0 0.0
  %47 = vmatpush1.msra.mxu0 0.0
  %48 = vmatprep.subr.mxu0 0.0
  %49 = vmatpush1.msra.mxu0 0.0
  %50 = vmatprep.subr.mxu0 0.0
  %51 = vmatpush1.msra.mxu0 0.0
  %52 = vmatprep.subr.mxu0 0.0
  %53 = vmatpush1.msra.mxu0 0.0
  %54 = vmatprep.subr.mxu0 0.0
  %55 = vmatpush1.msra.mxu0 0.0
  %56 = vmatprep.subr.mxu0 0.0
  %57 = vmatpush1.msra.mxu0 0.0
  %58 = vmatprep.subr.mxu0 0.0
  %59 = vmatpush1.msra.mxu0 0.0
  %60 = vmatprep.subr.mxu0 %v16
  %61 = vmatpush1.msra.mxu0 %v15
  %62 = vmatprep.subr.mxu0 0.0
  %63 = vmatpush2.msra.mxu0 0.0
  %64 = vmatprep.subr.mxu0 0.0
  %65 = vmatpush2.msra.mxu0 0.0
  %66 = vmatprep.subr.mxu0 0.0
  %67 = vmatpush2.msra.mxu0 0.0
  %68 = vmatprep.subr.mxu0 0.0
  %69 = vmatpush2.msra.mxu0 0.0
  %70 = vmatprep.subr.mxu0 0.0
  %71 = vmatpush2.msra.mxu0 0.0
  %72 = vmatprep.subr.mxu0 0.0
  %73 = vmatpush2.msra.mxu0 0.0
  %74 = vmatprep.subr.mxu0 0.0
  %75 = vmatpush2.msra.mxu0 0.0
  %76 = vmatprep.subr.mxu0 0.0
  %77 = vmatpush2.msra.mxu0 0.0
  %78 = vmatprep.subr.mxu0 0.0
  %79 = vmatpush2.msra.mxu0 0.0
  %80 = vmatprep.subr.mxu0 0.0
  %81 = vmatpush2.msra.mxu0 0.0
  %82 = vmatprep.subr.mxu0 0.0
  %83 = vmatpush2.msra.mxu0 0.0
  %84 = vmatprep.subr.mxu0 0.0
  %85 = vmatpush2.msra.mxu0 0.0
  %86 = vmatprep.subr.mxu0 0.0
  %87 = vmatpush2.msra.mxu0 0.0
  %88 = vmatprep.subr.mxu0 0.0
  %89 = vmatpush2.msra.mxu0 0.0
  %90 = vmatprep.subr.mxu0 0.0
  %91 = vmatpush2.msra.mxu0 0.0
  %92 = vmatprep.subr.mxu0 0.0
  %93 = vmatpush2.msra.mxu0 0.0
  %94 = vmatprep.mubr.f32.mxu0 0.0
  %95 = vmatmul.mubr.f32.gmra.mxu0 %v22
  %v96 = vpop.f32.mrf.mxu0
  %v97 = vadd.f32 0.0, %v96
  %v98 = vpop.f32.mrf.mxu0
  %v99 = vadd.f32 0.0, %v98
  %100 = vmatprep.mubr.f32.mxu0 0.0
  %101 = vmatmul.mubr.f32.gmra.mxu0 %v25
  %v102 = vpop.f32.mrf.mxu0
  %v103 = vadd.f32 0.0, %v102
  %v104 = vpop.f32.mrf.mxu0
  %v105 = vadd.f32 0.0, %v104
  %106 = vmatprep.mubr.f32.mxu0 0.0
  %107 = vmatmul.mubr.f32.gmra.mxu0 %v28
  %v108 = vpop.f32.mrf.mxu0
  %v109 = vadd.f32 0.0, %v108
  %v110 = vpop.f32.mrf.mxu0
  %v111 = vadd.f32 0.0, %v110
  %112 = vdwg.mxu0
  %113 = vmatprep.subr.mxu0 0.0
  %114 = vmatpush1.msra.mxu0 0.0
  %115 = vmatprep.subr.mxu0 0.0
  %116 = vmatpush1.msra.mxu0 0.0
  %117 = vmatprep.subr.mxu0 0.0
  %118 = vmatpush1.msra.mxu0 0.0
  %119 = vmatprep.subr.mxu0 0.0
  %120 = vmatpush1.msra.mxu0 0.0
  %121 = vmatprep.subr.mxu0 0.0
  %122 = vmatpush1.msra.mxu0 0.0
  %123 = vmatprep.subr.mxu0 0.0
  %124 = vmatpush1.msra.mxu0 0.0
  %125 = vmatprep.subr.mxu0 0.0
  %126 = vmatpush1.msra.mxu0 0.0
  %127 = vmatprep.subr.mxu0 0.0
  %128 = vmatpush1.msra.mxu0 0.0
  %129 = vmatprep.subr.mxu0 0.0
  %130 = vmatpush1.msra.mxu0 0.0
  %131 = vmatprep.subr.mxu0 0.0
  %132 = vmatpush1.msra.mxu0 0.0
  %133 = vmatprep.subr.mxu0 0.0
  %134 = vmatpush1.msra.mxu0 0.0
  %135 = vmatprep.subr.mxu0 0.0
  %136 = vmatpush1.msra.mxu0 0.0
  %137 = vmatprep.subr.mxu0 0.0
  %138 = vmatpush1.msra.mxu0 0.0
  %139 = vmatprep.subr.mxu0 0.0
  %140 = vmatpush1.msra.mxu0 0.0
  %141 = vmatprep.subr.mxu0 0.0
  %142 = vmatpush1.msra.mxu0 0.0
  %143 = vmatprep.subr.mxu0 %v18
  %144 = vmatpush1.msra.mxu0 %v17
  %145 = vmatprep.subr.mxu0 0.0
  %146 = vmatpush2.msra.mxu0 0.0
  %147 = vmatprep.subr.mxu0 0.0
  %148 = vmatpush2.msra.mxu0 0.0
  %149 = vmatprep.subr.mxu0 0.0
  %150 = vmatpush2.msra.mxu0 0.0
  %151 = vmatprep.subr.mxu0 0.0
  %152 = vmatpush2.msra.mxu0 0.0
  %153 = vmatprep.subr.mxu0 0.0
  %154 = vmatpush2.msra.mxu0 0.0
  %155 = vmatprep.subr.mxu0 0.0
  %156 = vmatpush2.msra.mxu0 0.0
  %157 = vmatprep.subr.mxu0 0.0
  %158 = vmatpush2.msra.mxu0 0.0
  %159 = vmatprep.subr.mxu0 0.0
  %160 = vmatpush2.msra.mxu0 0.0
  %161 = vmatprep.subr.mxu0 0.0
  %162 = vmatpush2.msra.mxu0 0.0
  %163 = vmatprep.subr.mxu0 0.0
  %164 = vmatpush2.msra.mxu0 0.0
  %165 = vmatprep.subr.mxu0 0.0
  %166 = vmatpush2.msra.mxu0 0.0
  %167 = vmatprep.subr.mxu0 0.0
  %168 = vmatpush2.msra.mxu0 0.0
  %169 = vmatprep.subr.mxu0 0.0
  %170 = vmatpush2.msra.mxu0 0.0
  %171 = vmatprep.subr.mxu0 0.0
  %172 = vmatpush2.msra.mxu0 0.0
  %173 = vmatprep.subr.mxu0 0.0
  %174 = vmatpush2.msra.mxu0 0.0
  %175 = vmatprep.subr.mxu0 0.0
  %176 = vmatpush2.msra.mxu0 0.0
  %177 = vmatprep.mubr.f32.mxu0 0.0
  %178 = vmatmul.mubr.f32.gmra.mxu0 %v22
  %v179 = vpop.f32.mrf.mxu0
  %v180 = vadd.f32 0.0, %v179
  %v181 = vpop.f32.mrf.mxu0
  %v182 = vadd.f32 0.0, %v181
  %183 = vmatprep.mubr.f32.mxu0 0.0
  %184 = vmatmul.mubr.f32.gmra.mxu0 %v25
  %v185 = vpop.f32.mrf.mxu0
  %v186 = vadd.f32 0.0, %v185
  %v187 = vpop.f32.mrf.mxu0
  %v188 = vadd.f32 0.0, %v187
  %189 = vmatprep.mubr.f32.mxu0 0.0
  %190 = vmatmul.mubr.f32.gmra.mxu0 %v28
  %v191 = vpop.f32.mrf.mxu0
  %v192 = vadd.f32 0.0, %v191
  %v193 = vpop.f32.mrf.mxu0
  %v194 = vadd.f32 0.0, %v193
  %195 = vdwg.mxu0
  %196 = vmatprep.subr.mxu0 0.0
  %197 = vmatpush1.msra.mxu0 0.0
  %198 = vmatprep.subr.mxu0 0.0
  %199 = vmatpush1.msra.mxu0 0.0
  %200 = vmatprep.subr.mxu0 0.0
  %201 = vmatpush1.msra.mxu0 0.0
  %202 = vmatprep.subr.mxu0 0.0
  %203 = vmatpush1.msra.mxu0 0.0
  %204 = vmatprep.subr.mxu0 0.0
  %205 = vmatpush1.msra.mxu0 0.0
  %206 = vmatprep.subr.mxu0 0.0
  %207 = vmatpush1.msra.mxu0 0.0
  %208 = vmatprep.subr.mxu0 0.0
  %209 = vmatpush1.msra.mxu0 0.0
  %210 = vmatprep.subr.mxu0 0.0
  %211 = vmatpush1.msra.mxu0 0.0
  %212 = vmatprep.subr.mxu0 0.0
  %213 = vmatpush1.msra.mxu0 0.0
  %214 = vmatprep.subr.mxu0 0.0
  %215 = vmatpush1.msra.mxu0 0.0
  %216 = vmatprep.subr.mxu0 0.0
  %217 = vmatpush1.msra.mxu0 0.0
  %218 = vmatprep.subr.mxu0 0.0
  %219 = vmatpush1.msra.mxu0 0.0
  %220 = vmatprep.subr.mxu0 0.0
  %221 = vmatpush1.msra.mxu0 0.0
  %222 = vmatprep.subr.mxu0 0.0
  %223 = vmatpush1.msra.mxu0 0.0
  %224 = vmatprep.subr.mxu0 0.0
  %225 = vmatpush1.msra.mxu0 0.0
  %226 = vmatprep.subr.mxu0 0.0
  %227 = vmatpush1.msra.mxu0 %v19
  %228 = vmatprep.subr.mxu0 0.0
  %229 = vmatpush2.msra.mxu0 0.0
  %230 = vmatprep.subr.mxu0 0.0
  %231 = vmatpush2.msra.mxu0 0.0
  %232 = vmatprep.subr.mxu0 0.0
  %233 = vmatpush2.msra.mxu0 0.0
  %234 = vmatprep.subr.mxu0 0.0
  %235 = vmatpush2.msra.mxu0 0.0
  %236 = vmatprep.subr.mxu0 0.0
  %237 = vmatpush2.msra.mxu0 0.0
  %238 = vmatprep.subr.mxu0 0.0
  %239 = vmatpush2.msra.mxu0 0.0
  %240 = vmatprep.subr.mxu0 0.0
  %241 = vmatpush2.msra.mxu0 0.0
  %242 = vmatprep.subr.mxu0 0.0
  %243 = vmatpush2.msra.mxu0 0.0
  %244 = vmatprep.subr.mxu0 0.0
  %245 = vmatpush2.msra.mxu0 0.0
  %246 = vmatprep.subr.mxu0 0.0
  %247 = vmatpush2.msra.mxu0 0.0
  %248 = vmatprep.subr.mxu0 0.0
  %249 = vmatpush2.msra.mxu0 0.0
  %250 = vmatprep.subr.mxu0 0.0
  %251 = vmatpush2.msra.mxu0 0.0
  %252 = vmatprep.subr.mxu0 0.0
  %253 = vmatpush2.msra.mxu0 0.0
  %254 = vmatprep.subr.mxu0 0.0
  %255 = vmatpush2.msra.mxu0 0.0
  %256 = vmatprep.subr.mxu0 0.0
  %257 = vmatpush2.msra.mxu0 0.0
  %258 = vmatprep.subr.mxu0 0.0
  %259 = vmatpush2.msra.mxu0 0.0
  %260 = vmatprep.mubr.f32.mxu0 0.0
  %261 = vmatmul.mubr.f32.gmra.mxu0 %v22
  %v262 = vpop.f32.mrf.mxu0
  %v263 = vadd.f32 0.0, %v262
  %v264 = vpop.f32.mrf.mxu0
  %265 = vmatprep.mubr.f32.mxu0 0.0
  %266 = vmatmul.mubr.f32.gmra.mxu0 %v25
  %v267 = vpop.f32.mrf.mxu0
  %v268 = vadd.f32 0.0, %v267
  %v269 = vpop.f32.mrf.mxu0
  %270 = vmatprep.mubr.f32.mxu0 0.0
  %271 = vmatmul.mubr.f32.gmra.mxu0 %v28
  %v272 = vpop.f32.mrf.mxu0
  %v273 = vadd.f32 0.0, %v272
  %v274 = vpop.f32.mrf.mxu0
  %275 = vdwg.mxu0
  %v276 = vld [vmem:[%s0] sm:$0xff]
  %v277 = vld [vmem:[%s0 + $0x28] sm:$0xff]
  %v278 = vld [vmem:[%s0 + $0x50] sm:$0xff]
  %vm279 = vcmask 195584
  %v281 = vsel %vm279, %v276, 0
  %v284 = vsel %vm279, %v277, 0
  %v287 = vsel %vm279, %v278, 0
  %289 = vmatprep.subr.mxu0 0.0
  %290 = vmatpush1.msra.mxu0 0.0
  %291 = vmatprep.subr.mxu0 0.0
  %292 = vmatpush1.msra.mxu0 0.0
  %293 = vmatprep.subr.mxu0 0.0
  %294 = vmatpush1.msra.mxu0 0.0
  %295 = vmatprep.subr.mxu0 0.0
  %296 = vmatpush1.msra.mxu0 0.0
  %297 = vmatprep.subr.mxu0 0.0
  %298 = vmatpush1.msra.mxu0 0.0
  %299 = vmatprep.subr.mxu0 0.0
  %300 = vmatpush1.msra.mxu0 0.0
  %301 = vmatprep.subr.mxu0 0.0
  %302 = vmatpush1.msra.mxu0 0.0
  %303 = vmatprep.subr.mxu0 0.0
  %304 = vmatpush1.msra.mxu0 0.0
  %305 = vmatprep.subr.mxu0 0.0
  %306 = vmatpush1.msra.mxu0 0.0
  %307 = vmatprep.subr.mxu0 0.0
  %308 = vmatpush1.msra.mxu0 0.0
  %309 = vmatprep.subr.mxu0 0.0
  %310 = vmatpush1.msra.mxu0 0.0
  %311 = vmatprep.subr.mxu0 0.0
  %312 = vmatpush1.msra.mxu0 0.0
  %313 = vmatprep.subr.mxu0 0.0
  %314 = vmatpush1.msra.mxu0 0.0
  %315 = vmatprep.subr.mxu0 0.0
  %316 = vmatpush1.msra.mxu0 %v109
  %317 = vmatprep.subr.mxu0 0.0
  %318 = vmatpush1.msra.mxu0 %v103
  %319 = vmatprep.subr.mxu0 0.0
  %320 = vmatpush1.msra.mxu0 %v97
  %321 = vmatprep.subr.mxu0 0.0
  %322 = vmatpush2.msra.mxu0 0.0
  %323 = vmatprep.subr.mxu0 0.0
  %324 = vmatpush2.msra.mxu0 0.0
  %325 = vmatprep.subr.mxu0 0.0
  %326 = vmatpush2.msra.mxu0 0.0
  %327 = vmatprep.subr.mxu0 0.0
  %328 = vmatpush2.msra.mxu0 0.0
  %329 = vmatprep.subr.mxu0 0.0
  %330 = vmatpush2.msra.mxu0 0.0
  %331 = vmatprep.subr.mxu0 0.0
  %332 = vmatpush2.msra.mxu0 0.0
  %333 = vmatprep.subr.mxu0 0.0
  %334 = vmatpush2.msra.mxu0 0.0
  %335 = vmatprep.subr.mxu0 0.0
  %336 = vmatpush2.msra.mxu0 0.0
  %337 = vmatprep.subr.mxu0 0.0
  %338 = vmatpush2.msra.mxu0 0.0
  %339 = vmatprep.subr.mxu0 0.0
  %340 = vmatpush2.msra.mxu0 0.0
  %341 = vmatprep.subr.mxu0 0.0
  %342 = vmatpush2.msra.mxu0 0.0
  %343 = vmatprep.subr.mxu0 0.0
  %344 = vmatpush2.msra.mxu0 0.0
  %345 = vmatprep.subr.mxu0 0.0
  %346 = vmatpush2.msra.mxu0 0.0
  %347 = vmatprep.subr.mxu0 0.0
  %348 = vmatpush2.msra.mxu0 0.0
  %349 = vmatprep.subr.mxu0 0.0
  %350 = vmatpush2.msra.mxu0 0.0
  %351 = vmatprep.subr.mxu0 0.0
  %352 = vmatpush2.msra.mxu0 0.0
  %353 = vmatprep.mubr.f32.mxu0 0.0
  %354 = vmatmul.mubr.f32.gmra.mxu0 %v281
  %v355 = vpop.f32.mrf.mxu0
  %v356 = vadd.f32 0.0, %v355
  %v357 = vpop.f32.mrf.mxu0
  %358 = vmatprep.mubr.f32.mxu0 0.0
  %359 = vmatmul.mubr.f32.gmra.mxu0 %v284
  %v360 = vpop.f32.mrf.mxu0
  %v361 = vadd.f32 0.0, %v360
  %v362 = vpop.f32.mrf.mxu0
  %363 = vmatprep.mubr.f32.mxu0 0.0
  %364 = vmatmul.mubr.f32.gmra.mxu0 %v287
  %v365 = vpop.f32.mrf.mxu0
  %v366 = vadd.f32 0.0, %v365
  %v367 = vpop.f32.mrf.mxu0
  %368 = vdwg.mxu0
  %v369 = vadd.f32 %v263, %v356
  %v370 = vadd.f32 %v268, %v361
  %v371 = vadd.f32 %v273, %v366
  %v372 = vld [vmem:[%s0 + $0x8] sm:$0xff]
  %v373 = vld [vmem:[%s0 + $0x30] sm:$0xff]
  %v374 = vld [vmem:[%s0 + $0x58] sm:$0xff]
  %v376 = vsel %vm279, %v372, 0
  %v379 = vsel %vm279, %v373, 0
  %v382 = vsel %vm279, %v374, 0
  %384 = vmatprep.subr.mxu0 0.0
  %385 = vmatpush1.msra.mxu0 0.0
  %386 = vmatprep.subr.mxu0 0.0
  %387 = vmatpush1.msra.mxu0 0.0
  %388 = vmatprep.subr.mxu0 0.0
  %389 = vmatpush1.msra.mxu0 0.0
  %390 = vmatprep.subr.mxu0 0.0
  %391 = vmatpush1.msra.mxu0 0.0
  %392 = vmatprep.subr.mxu0 0.0
  %393 = vmatpush1.msra.mxu0 0.0
  %394 = vmatprep.subr.mxu0 0.0
  %395 = vmatpush1.msra.mxu0 0.0
  %396 = vmatprep.subr.mxu0 0.0
  %397 = vmatpush1.msra.mxu0 0.0
  %398 = vmatprep.subr.mxu0 0.0
  %399 = vmatpush1.msra.mxu0 0.0
  %400 = vmatprep.subr.mxu0 0.0
  %401 = vmatpush1.msra.mxu0 0.0
  %402 = vmatprep.subr.mxu0 0.0
  %403 = vmatpush1.msra.mxu0 0.0
  %404 = vmatprep.subr.mxu0 0.0
  %405 = vmatpush1.msra.mxu0 0.0
  %406 = vmatprep.subr.mxu0 0.0
  %407 = vmatpush1.msra.mxu0 0.0
  %408 = vmatprep.subr.mxu0 0.0
  %409 = vmatpush1.msra.mxu0 0.0
  %410 = vmatprep.subr.mxu0 0.0
  %411 = vmatpush1.msra.mxu0 %v111
  %412 = vmatprep.subr.mxu0 0.0
  %413 = vmatpush1.msra.mxu0 %v105
  %414 = vmatprep.subr.mxu0 0.0
  %415 = vmatpush1.msra.mxu0 %v99
  %416 = vmatprep.subr.mxu0 0.0
  %417 = vmatpush2.msra.mxu0 0.0
  %418 = vmatprep.subr.mxu0 0.0
  %419 = vmatpush2.msra.mxu0 0.0
  %420 = vmatprep.subr.mxu0 0.0
  %421 = vmatpush2.msra.mxu0 0.0
  %422 = vmatprep.subr.mxu0 0.0
  %423 = vmatpush2.msra.mxu0 0.0
  %424 = vmatprep.subr.mxu0 0.0
  %425 = vmatpush2.msra.mxu0 0.0
  %426 = vmatprep.subr.mxu0 0.0
  %427 = vmatpush2.msra.mxu0 0.0
  %428 = vmatprep.subr.mxu0 0.0
  %429 = vmatpush2.msra.mxu0 0.0
  %430 = vmatprep.subr.mxu0 0.0
  %431 = vmatpush2.msra.mxu0 0.0
  %432 = vmatprep.subr.mxu0 0.0
  %433 = vmatpush2.msra.mxu0 0.0
  %434 = vmatprep.subr.mxu0 0.0
  %435 = vmatpush2.msra.mxu0 0.0
  %436 = vmatprep.subr.mxu0 0.0
  %437 = vmatpush2.msra.mxu0 0.0
  %438 = vmatprep.subr.mxu0 0.0
  %439 = vmatpush2.msra.mxu0 0.0
  %440 = vmatprep.subr.mxu0 0.0
  %441 = vmatpush2.msra.mxu0 0.0
  %442 = vmatprep.subr.mxu0 0.0
  %443 = vmatpush2.msra.mxu0 0.0
  %444 = vmatprep.subr.mxu0 0.0
  %445 = vmatpush2.msra.mxu0 0.0
  %446 = vmatprep.subr.mxu0 0.0
  %447 = vmatpush2.msra.mxu0 0.0
  %448 = vmatprep.mubr.f32.mxu0 0.0
  %449 = vmatmul.mubr.f32.gmra.mxu0 %v376
  %v450 = vpop.f32.mrf.mxu0
  %v451 = vadd.f32 0.0, %v450
  %v452 = vpop.f32.mrf.mxu0
  %453 = vmatprep.mubr.f32.mxu0 0.0
  %454 = vmatmul.mubr.f32.gmra.mxu0 %v379
  %v455 = vpop.f32.mrf.mxu0
  %v456 = vadd.f32 0.0, %v455
  %v457 = vpop.f32.mrf.mxu0
  %458 = vmatprep.mubr.f32.mxu0 0.0
  %459 = vmatmul.mubr.f32.gmra.mxu0 %v382
  %v460 = vpop.f32.mrf.mxu0
  %v461 = vadd.f32 0.0, %v460
  %v462 = vpop.f32.mrf.mxu0
  %463 = vdwg.mxu0
  %v464 = vadd.f32 %v369, %v451
  %v465 = vadd.f32 %v370, %v456
  %v466 = vadd.f32 %v371, %v461
  %v467 = vld [vmem:[%s0 + $0x10] sm:$0xff]
  %v468 = vld [vmem:[%s0 + $0x38] sm:$0xff]
  %v469 = vld [vmem:[%s0 + $0x60] sm:$0xff]
  %v471 = vsel %vm279, %v467, 0
  %v474 = vsel %vm279, %v468, 0
  %v477 = vsel %vm279, %v469, 0
  %479 = vmatprep.subr.mxu0 0.0
  %480 = vmatpush1.msra.mxu0 0.0
  %481 = vmatprep.subr.mxu0 0.0
  %482 = vmatpush1.msra.mxu0 0.0
  %483 = vmatprep.subr.mxu0 0.0
  %484 = vmatpush1.msra.mxu0 0.0
  %485 = vmatprep.subr.mxu0 0.0
  %486 = vmatpush1.msra.mxu0 0.0
  %487 = vmatprep.subr.mxu0 0.0
  %488 = vmatpush1.msra.mxu0 0.0
  %489 = vmatprep.subr.mxu0 0.0
  %490 = vmatpush1.msra.mxu0 0.0
  %491 = vmatprep.subr.mxu0 0.0
  %492 = vmatpush1.msra.mxu0 0.0
  %493 = vmatprep.subr.mxu0 0.0
  %494 = vmatpush1.msra.mxu0 0.0
  %495 = vmatprep.subr.mxu0 0.0
  %496 = vmatpush1.msra.mxu0 0.0
  %497 = vmatprep.subr.mxu0 0.0
  %498 = vmatpush1.msra.mxu0 0.0
  %499 = vmatprep.subr.mxu0 0.0
  %500 = vmatpush1.msra.mxu0 0.0
  %501 = vmatprep.subr.mxu0 0.0
  %502 = vmatpush1.msra.mxu0 0.0
  %503 = vmatprep.subr.mxu0 0.0
  %504 = vmatpush1.msra.mxu0 0.0
  %505 = vmatprep.subr.mxu0 0.0
  %506 = vmatpush1.msra.mxu0 %v192
  %507 = vmatprep.subr.mxu0 0.0
  %508 = vmatpush1.msra.mxu0 %v186
  %509 = vmatprep.subr.mxu0 0.0
  %510 = vmatpush1.msra.mxu0 %v180
  %511 = vmatprep.subr.mxu0 0.0
  %512 = vmatpush2.msra.mxu0 0.0
  %513 = vmatprep.subr.mxu0 0.0
  %514 = vmatpush2.msra.mxu0 0.0
  %515 = vmatprep.subr.mxu0 0.0
  %516 = vmatpush2.msra.mxu0 0.0
  %517 = vmatprep.subr.mxu0 0.0
  %518 = vmatpush2.msra.mxu0 0.0
  %519 = vmatprep.subr.mxu0 0.0
  %520 = vmatpush2.msra.mxu0 0.0
  %521 = vmatprep.subr.mxu0 0.0
  %522 = vmatpush2.msra.mxu0 0.0
  %523 = vmatprep.subr.mxu0 0.0
  %524 = vmatpush2.msra.mxu0 0.0
  %525 = vmatprep.subr.mxu0 0.0
  %526 = vmatpush2.msra.mxu0 0.0
  %527 = vmatprep.subr.mxu0 0.0
  %528 = vmatpush2.msra.mxu0 0.0
  %529 = vmatprep.subr.mxu0 0.0
  %530 = vmatpush2.msra.mxu0 0.0
  %531 = vmatprep.subr.mxu0 0.0
  %532 = vmatpush2.msra.mxu0 0.0
  %533 = vmatprep.subr.mxu0 0.0
  %534 = vmatpush2.msra.mxu0 0.0
  %535 = vmatprep.subr.mxu0 0.0
  %536 = vmatpush2.msra.mxu0 0.0
  %537 = vmatprep.subr.mxu0 0.0
  %538 = vmatpush2.msra.mxu0 0.0
  %539 = vmatprep.subr.mxu0 0.0
  %540 = vmatpush2.msra.mxu0 0.0
  %541 = vmatprep.subr.mxu0 0.0
  %542 = vmatpush2.msra.mxu0 0.0
  %543 = vmatprep.mubr.f32.mxu0 0.0
  %544 = vmatmul.mubr.f32.gmra.mxu0 %v471
  %v545 = vpop.f32.mrf.mxu0
  %v546 = vadd.f32 0.0, %v545
  %v547 = vpop.f32.mrf.mxu0
  %548 = vmatprep.mubr.f32.mxu0 0.0
  %549 = vmatmul.mubr.f32.gmra.mxu0 %v474
  %v550 = vpop.f32.mrf.mxu0
  %v551 = vadd.f32 0.0, %v550
  %v552 = vpop.f32.mrf.mxu0
  %553 = vmatprep.mubr.f32.mxu0 0.0
  %554 = vmatmul.mubr.f32.gmra.mxu0 %v477
  %v555 = vpop.f32.mrf.mxu0
  %v556 = vadd.f32 0.0, %v555
  %v557 = vpop.f32.mrf.mxu0
  %558 = vdwg.mxu0
  %v559 = vadd.f32 %v464, %v546
  %v560 = vadd.f32 %v465, %v551
  %v561 = vadd.f32 %v466, %v556
  %v562 = vld [vmem:[%s0 + $0x18] sm:$0xff]
  %v563 = vld [vmem:[%s0 + $0x40] sm:$0xff]
  %v564 = vld [vmem:[%s0 + $0x68] sm:$0xff]
  %v566 = vsel %vm279, %v562, 0
  %v569 = vsel %vm279, %v563, 0
  %v572 = vsel %vm279, %v564, 0
  %574 = vmatprep.subr.mxu0 0.0
  %575 = vmatpush1.msra.mxu0 0.0
  %576 = vmatprep.subr.mxu0 0.0
  %577 = vmatpush1.msra.mxu0 0.0
  %578 = vmatprep.subr.mxu0 0.0
  %579 = vmatpush1.msra.mxu0 0.0
  %580 = vmatprep.subr.mxu0 0.0
  %581 = vmatpush1.msra.mxu0 0.0
  %582 = vmatprep.subr.mxu0 0.0
  %583 = vmatpush1.msra.mxu0 0.0
  %584 = vmatprep.subr.mxu0 0.0
  %585 = vmatpush1.msra.mxu0 0.0
  %586 = vmatprep.subr.mxu0 0.0
  %587 = vmatpush1.msra.mxu0 0.0
  %588 = vmatprep.subr.mxu0 0.0
  %589 = vmatpush1.msra.mxu0 0.0
  %590 = vmatprep.subr.mxu0 0.0
  %591 = vmatpush1.msra.mxu0 0.0
  %592 = vmatprep.subr.mxu0 0.0
  %593 = vmatpush1.msra.mxu0 0.0
  %594 = vmatprep.subr.mxu0 0.0
  %595 = vmatpush1.msra.mxu0 0.0
  %596 = vmatprep.subr.mxu0 0.0
  %597 = vmatpush1.msra.mxu0 0.0
  %598 = vmatprep.subr.mxu0 0.0
  %599 = vmatpush1.msra.mxu0 0.0
  %600 = vmatprep.subr.mxu0 0.0
  %601 = vmatpush1.msra.mxu0 %v194
  %602 = vmatprep.subr.mxu0 0.0
  %603 = vmatpush1.msra.mxu0 %v188
  %604 = vmatprep.subr.mxu0 0.0
  %605 = vmatpush1.msra.mxu0 %v182
  %606 = vmatprep.subr.mxu0 0.0
  %607 = vmatpush2.msra.mxu0 0.0
  %608 = vmatprep.subr.mxu0 0.0
  %609 = vmatpush2.msra.mxu0 0.0
  %610 = vmatprep.subr.mxu0 0.0
  %611 = vmatpush2.msra.mxu0 0.0
  %612 = vmatprep.subr.mxu0 0.0
  %613 = vmatpush2.msra.mxu0 0.0
  %614 = vmatprep.subr.mxu0 0.0
  %615 = vmatpush2.msra.mxu0 0.0
  %616 = vmatprep.subr.mxu0 0.0
  %617 = vmatpush2.msra.mxu0 0.0
  %618 = vmatprep.subr.mxu0 0.0
  %619 = vmatpush2.msra.mxu0 0.0
  %620 = vmatprep.subr.mxu0 0.0
  %621 = vmatpush2.msra.mxu0 0.0
  %622 = vmatprep.subr.mxu0 0.0
  %623 = vmatpush2.msra.mxu0 0.0
  %624 = vmatprep.subr.mxu0 0.0
  %625 = vmatpush2.msra.mxu0 0.0
  %626 = vmatprep.subr.mxu0 0.0
  %627 = vmatpush2.msra.mxu0 0.0
  %628 = vmatprep.subr.mxu0 0.0
  %629 = vmatpush2.msra.mxu0 0.0
  %630 = vmatprep.subr.mxu0 0.0
  %631 = vmatpush2.msra.mxu0 0.0
  %632 = vmatprep.subr.mxu0 0.0
  %633 = vmatpush2.msra.mxu0 0.0
  %634 = vmatprep.subr.mxu0 0.0
  %635 = vmatpush2.msra.mxu0 0.0
  %636 = vmatprep.subr.mxu0 0.0
  %637 = vmatpush2.msra.mxu0 0.0
  %638 = vmatprep.mubr.f32.mxu0 0.0
  %639 = vmatmul.mubr.f32.gmra.mxu0 %v566
  %v640 = vpop.f32.mrf.mxu0
  %v641 = vadd.f32 0.0, %v640
  %v642 = vpop.f32.mrf.mxu0
  %643 = vmatprep.mubr.f32.mxu0 0.0
  %644 = vmatmul.mubr.f32.gmra.mxu0 %v569
  %v645 = vpop.f32.mrf.mxu0
  %v646 = vadd.f32 0.0, %v645
  %v647 = vpop.f32.mrf.mxu0
  %648 = vmatprep.mubr.f32.mxu0 0.0
  %649 = vmatmul.mubr.f32.gmra.mxu0 %v572
  %v650 = vpop.f32.mrf.mxu0
  %v651 = vadd.f32 0.0, %v650
  %v652 = vpop.f32.mrf.mxu0
  %653 = vdwg.mxu0
  %v654 = vadd.f32 %v559, %v641
  %v655 = vadd.f32 %v560, %v646
  %v656 = vadd.f32 %v561, %v651
  %v657 = vtanh.pop %v654
  %v658 = vtanh.pop %v655
  %v659 = vtanh.pop %v656
  %v660 = vld [vmem:[%s1 + $0x28] sm:$0xff]
  %v661 = vld [vmem:[%s1 + $0x30] sm:$0xff]
  %v662 = vld [vmem:[%s1 + $0x38] sm:$0xff]
  %v663 = vld [vmem:[%s1 + $0x40] sm:$0xff]
  %v664 = vld [vmem:[%s1 + $0x48] sm:$0xff]
  %v665 = vld [vmem:[%s1 + $0x50] sm:$0xff]
  %v666 = vld [vmem:[%s1 + $0x58] sm:$0xff]
  %v667 = vld [vmem:[%s1 + $0x60] sm:$0xff]
  %v668 = vld [vmem:[%s1 + $0x68] sm:$0xff]
  %v669 = vld [vmem:[%s1 + $0x70] sm:$0xff]
  %v670 = vld [vmem:[%s1 + $0x78] sm:$0xff]
  %v671 = vld [vmem:[%s1 + $0x80] sm:$0xff]
  %v672 = vld [vmem:[%s1 + $0x88] sm:$0xff]
  %v673 = vld [vmem:[%s1 + $0x90] sm:$0xff]
  %v674 = vld [vmem:[%s1 + $0x98] sm:$0xff]
  %v675 = vld [vmem:[%s1 + $0xa0] sm:$0xff]
  %v676 = vld [vmem:[%s1 + $0xa8] sm:$0xff]
  %v677 = vld [vmem:[%s1 + $0xb0] sm:$0xff]
  %v678 = vld [vmem:[%s1 + $0xb8] sm:$0xff]
  %v679 = vld [vmem:[%s1 + $0xc0] sm:$0xff]
  %v680 = vld [vmem:[%s1 + $0xc8] sm:$0xff]
  %v681 = vld [vmem:[%s1 + $0xd0] sm:$0xff]
  %v682 = vld [vmem:[%s1 + $0xd8] sm:$0xff]
  %v683 = vld [vmem:[%s1 + $0xe0] sm:$0xff]
  %v684 = vld [vmem:[%s1 + $0xe8] sm:$0xff]
  %v685 = vld [vmem:[%s1 + $0xf0] sm:$0xff]
  %v686 = vld [vmem:[%s1 + $0xf8] sm:$0xff]
  %v687 = vld [vmem:[%s1 + $0x100] sm:$0xff]
  %v688 = vld [vmem:[%s1 + $0x108] sm:$0xff]
  %v689 = vld [vmem:[%s1 + $0x110] sm:$0xff]
  %v690 = vld [vmem:[%s1 + $0x118] sm:$0xff]
  %v691 = vld [vmem:[%s1 + $0x120] sm:$0xff]
  %v692 = vld [vmem:[%s1 + $0x128] sm:$0xff]
  %v693 = vld [vmem:[%s1 + $0x130] sm:$0xff]
  %v694 = vld [vmem:[%s1 + $0x138] sm:$0xff]
  %v695 = vld [vmem:[%s1 + $0x140] sm:$0xff]
  %v696 = vld [vmem:[%s1 + $0x148] sm:$0xff]
  %v697 = vld [vmem:[%s1 + $0x150] sm:$0xff]
  %v698 = vld [vmem:[%s1 + $0x158] sm:$0xff]
  %v699 = vld [vmem:[%s1 + $0x160] sm:$0xff]
  %v700 = vld [vmem:[%s1 + $0x168] sm:$0xff]
  %v701 = vld [vmem:[%s1 + $0x170] sm:$0xff]
  %v702 = vld [vmem:[%s1 + $0x178] sm:$0xff]
  %v703 = vld [vmem:[%s1 + $0x180] sm:$0xff]
  %v704 = vld [vmem:[%s1 + $0x188] sm:$0xff]
  %v705 = vld [vmem:[%s1 + $0x190] sm:$0xff]
  %v706 = vld [vmem:[%s1 + $0x198] sm:$0xff]
  %v707 = vld [vmem:[%s1 + $0x1a0] sm:$0xff]
  %v708 = vld [vmem:[%s1 + $0x1a8] sm:$0xff]
  %v709 = vld [vmem:[%s1 + $0x1b0] sm:$0xff]
  %v710 = vld [vmem:[%s1 + $0x1b8] sm:$0xff]
  %v711 = vld [vmem:[%s1 + $0x1c0] sm:$0xff]
  %v712 = vld [vmem:[%s1 + $0x1c8] sm:$0xff]
  %v713 = vld [vmem:[%s1 + $0x1d0] sm:$0xff]
  %v714 = vld [vmem:[%s1 + $0x1d8] sm:$0xff]
  %v715 = vld [vmem:[%s1 + $0x1e0] sm:$0xff]
  %v716 = vld [vmem:[%s1 + $0x1e8] sm:$0xff]
  %v717 = vld [vmem:[%s1 + $0x1f0] sm:$0xff]
  %v718 = vld [vmem:[%s1 + $0x1f8] sm:$0xff]
  %v719 = vld [vmem:[%s1 + $0x200] sm:$0xff]
  %v720 = vld [vmem:[%s1 + $0x208] sm:$0xff]
  %v721 = vld [vmem:[%s1 + $0x210] sm:$0xff]
  %v722 = vld [vmem:[%s1 + $0x218] sm:$0xff]
  %v723 = vld [vmem:[%s1 + $0x220] sm:$0xff]
  %v724 = vld [vmem:[%s1 + $0x228] sm:$0xff]
  %v725 = vld [vmem:[%s1 + $0x230] sm:$0xff]
  %v726 = vld [vmem:[%s1 + $0x238] sm:$0xff]
  %v727 = vld [vmem:[%s1 + $0x240] sm:$0xff]
  %v728 = vld [vmem:[%s1 + $0x248] sm:$0xff]
  %v729 = vld [vmem:[%s1 + $0x250] sm:$0xff]
  %v730 = vld [vmem:[%s1 + $0x258] sm:$0xff]
  %v731 = vld [vmem:[%s1 + $0x260] sm:$0xff]
  %v732 = vld [vmem:[%s1 + $0x268] sm:$0xff]
  %v733 = vld [vmem:[%s1 + $0x270] sm:$0xff]
  %v734 = vld [vmem:[%s1 + $0x278] sm:$0xff]
  %v735 = vld [vmem:[%s1 + $0x280] sm:$0xff]
  %v736 = vld [vmem:[%s1 + $0x288] sm:$0xff]
  %v737 = vld [vmem:[%s1 + $0x290] sm:$0xff]
  %v738 = vld [vmem:[%s1 + $0x298] sm:$0xff]
  %v739 = vld [vmem:[%s1 + $0x2a0] sm:$0xff]
  %v740 = vld [vmem:[%s1 + $0x2a8] sm:$0xff]
  %v741 = vld [vmem:[%s1 + $0x2b0] sm:$0xff]
  %v742 = vld [vmem:[%s1 + $0x2b8] sm:$0xff]
  %v743 = vld [vmem:[%s1 + $0x2c0] sm:$0xff]
  %v744 = vld [vmem:[%s1 + $0x2c8] sm:$0xff]
  %745 = vmatprep.subr.mxu0 0.0
  %746 = vmatpush1.msra.mxu0 0.0
  %747 = vmatprep.subr.mxu0 0.0
  %748 = vmatpush1.msra.mxu0 0.0
  %749 = vmatprep.subr.mxu0 0.0
  %750 = vmatpush1.msra.mxu0 0.0
  %751 = vmatprep.subr.mxu0 0.0
  %752 = vmatpush1.msra.mxu0 0.0
  %753 = vmatprep.subr.mxu0 0.0
  %754 = vmatpush1.msra.mxu0 0.0
  %755 = vmatprep.subr.mxu0 0.0
  %756 = vmatpush1.msra.mxu0 0.0
  %757 = vmatprep.subr.mxu0 0.0
  %758 = vmatpush1.msra.mxu0 0.0
  %759 = vmatprep.subr.mxu0 0.0
  %760 = vmatpush1.msra.mxu0 0.0
  %761 = vmatprep.subr.mxu0 0.0
  %762 = vmatpush1.msra.mxu0 0.0
  %763 = vmatprep.subr.mxu0 0.0
  %764 = vmatpush1.msra.mxu0 0.0
  %765 = vmatprep.subr.mxu0 0.0
  %766 = vmatpush1.msra.mxu0 0.0
  %767 = vmatprep.subr.mxu0 0.0
  %768 = vmatpush1.msra.mxu0 0.0
  %769 = vmatprep.subr.mxu0 0.0
  %770 = vmatpush1.msra.mxu0 0.0
  %771 = vmatprep.subr.mxu0 0.0
  %772 = vmatpush1.msra.mxu0 0.0
  %773 = vmatprep.subr.mxu0 0.0
  %774 = vmatpush1.msra.mxu0 0.0
  %775 = vmatprep.subr.mxu0 %v741
  %776 = vmatpush1.msra.mxu0 %v740
  %777 = vmatprep.subr.mxu0 0.0
  %778 = vmatpush2.msra.mxu0 0.0
  %779 = vmatprep.subr.mxu0 0.0
  %780 = vmatpush2.msra.mxu0 0.0
  %781 = vmatprep.subr.mxu0 0.0
  %782 = vmatpush2.msra.mxu0 0.0
  %783 = vmatprep.subr.mxu0 0.0
  %784 = vmatpush2.msra.mxu0 0.0
  %785 = vmatprep.subr.mxu0 0.0
  %786 = vmatpush2.msra.mxu0 0.0
  %787 = vmatprep.subr.mxu0 0.0
  %788 = vmatpush2.msra.mxu0 0.0
  %789 = vmatprep.subr.mxu0 0.0
  %790 = vmatpush2.msra.mxu0 0.0
  %791 = vmatprep.subr.mxu0 0.0
  %792 = vmatpush2.msra.mxu0 0.0
  %793 = vmatprep.subr.mxu0 0.0
  %794 = vmatpush2.msra.mxu0 0.0
  %795 = vmatprep.subr.mxu0 0.0
  %796 = vmatpush2.msra.mxu0 0.0
  %797 = vmatprep.subr.mxu0 0.0
  %798 = vmatpush2.msra.mxu0 0.0
  %799 = vmatprep.subr.mxu0 0.0
  %800 = vmatpush2.msra.mxu0 0.0
  %801 = vmatprep.subr.mxu0 0.0
  %802 = vmatpush2.msra.mxu0 0.0
  %803 = vmatprep.subr.mxu0 0.0
  %804 = vmatpush2.msra.mxu0 0.0
  %805 = vmatprep.subr.mxu0 0.0
  %806 = vmatpush2.msra.mxu0 0.0
  %807 = vmatprep.subr.mxu0 0.0
  %808 = vmatpush2.msra.mxu0 0.0
  %809 = vmatprep.mubr.f32.mxu0 0.0
  %810 = vmatmul.mubr.f32.gmra.mxu0 %v22
  %v811 = vpop.f32.mrf.mxu0
  %v812 = vadd.f32 0.0, %v811
  %v813 = vpop.f32.mrf.mxu0
  %v814 = vadd.f32 0.0, %v813
  %815 = vmatprep.mubr.f32.mxu0 0.0
  %816 = vmatmul.mubr.f32.gmra.mxu0 %v25
  %v817 = vpop.f32.mrf.mxu0
  %v818 = vadd.f32 0.0, %v817
  %v819 = vpop.f32.mrf.mxu0
  %v820 = vadd.f32 0.0, %v819
  %821 = vmatprep.mubr.f32.mxu0 0.0
  %822 = vmatmul.mubr.f32.gmra.mxu0 %v28
  %v823 = vpop.f32.mrf.mxu0
  %v824 = vadd.f32 0.0, %v823
  %v825 = vpop.f32.mrf.mxu0
  %v826 = vadd.f32 0.0, %v825
  %827 = vdwg.mxu0
  %828 = vmatprep.subr.mxu0 0.0
  %829 = vmatpush1.msra.mxu0 0.0
  %830 = vmatprep.subr.mxu0 0.0
  %831 = vmatpush1.msra.mxu0 0.0
  %832 = vmatprep.subr.mxu0 0.0
  %833 = vmatpush1.msra.mxu0 0.0
  %834 = vmatprep.subr.mxu0 0.0
  %835 = vmatpush1.msra.mxu0 0.0
  %836 = vmatprep.subr.mxu0 0.0
  %837 = vmatpush1.msra.mxu0 0.0
  %838 = vmatprep.subr.mxu0 0.0
  %839 = vmatpush1.msra.mxu0 0.0
  %840 = vmatprep.subr.mxu0 0.0
  %841 = vmatpush1.msra.mxu0 0.0
  %842 = vmatprep.subr.mxu0 0.0
  %843 = vmatpush1.msra.mxu0 0.0
  %844 = vmatprep.subr.mxu0 0.0
  %845 = vmatpush1.msra.mxu0 0.0
  %846 = vmatprep.subr.mxu0 0.0
  %847 = vmatpush1.msra.mxu0 0.0
  %848 = vmatprep.subr.mxu0 0.0
  %849 = vmatpush1.msra.mxu0 0.0
  %850 = vmatprep.subr.mxu0 0.0
  %851 = vmatpush1.msra.mxu0 0.0
  %852 = vmatprep.subr.mxu0 0.0
  %853 = vmatpush1.msra.mxu0 0.0
  %854 = vmatprep.subr.mxu0 0.0
  %855 = vmatpush1.msra.mxu0 0.0
  %856 = vmatprep.subr.mxu0 0.0
  %857 = vmatpush1.msra.mxu0 0.0
  %858 = vmatprep.subr.mxu0 %v743
  %859 = vmatpush1.msra.mxu0 %v742
  %860 = vmatprep.subr.mxu0 0.0
  %861 = vmatpush2.msra.mxu0 0.0
  %862 = vmatprep.subr.mxu0 0.0
  %863 = vmatpush2.msra.mxu0 0.0
  %864 = vmatprep.subr.mxu0 0.0
  %865 = vmatpush2.msra.mxu0 0.0
  %866 = vmatprep.subr.mxu0 0.0
  %867 = vmatpush2.msra.mxu0 0.0
  %868 = vmatprep.subr.mxu0 0.0
  %869 = vmatpush2.msra.mxu0 0.0
  %870 = vmatprep.subr.mxu0 0.0
  %871 = vmatpush2.msra.mxu0 0.0
  %872 = vmatprep.subr.mxu0 0.0
  %873 = vmatpush2.msra.mxu0 0.0
  %874 = vmatprep.subr.mxu0 0.0
  %875 = vmatpush2.msra.mxu0 0.0
  %876 = vmatprep.subr.mxu0 0.0
  %877 = vmatpush2.msra.mxu0 0.0
  %878 = vmatprep.subr.mxu0 0.0
  %879 = vmatpush2.msra.mxu0 0.0
  %880 = vmatprep.subr.mxu0 0.0
  %881 = vmatpush2.msra.mxu0 0.0
  %882 = vmatprep.subr.mxu0 0.0
  %883 = vmatpush2.msra.mxu0 0.0
  %884 = vmatprep.subr.mxu0 0.0
  %885 = vmatpush2.msra.mxu0 0.0
  %886 = vmatprep.subr.mxu0 0.0
  %887 = vmatpush2.msra.mxu0 0.0
  %888 = vmatprep.subr.mxu0 0.0
  %889 = vmatpush2.msra.mxu0 0.0
  %890 = vmatprep.subr.mxu0 0.0
  %891 = vmatpush2.msra.mxu0 0.0
  %892 = vmatprep.mubr.f32.mxu0 0.0
  %893 = vmatmul.mubr.f32.gmra.mxu0 %v22
  %v894 = vpop.f32.mrf.mxu0
  %v895 = vadd.f32 0.0, %v894
  %v896 = vpop.f32.mrf.mxu0
  %v897 = vadd.f32 0.0, %v896
  %898 = vmatprep.mubr.f32.mxu0 0.0
  %899 = vmatmul.mubr.f32.gmra.mxu0 %v25
  %v900 = vpop.f32.mrf.mxu0
  %v901 = vadd.f32 0.0, %v900
  %v902 = vpop.f32.mrf.mxu0
  %v903 = vadd.f32 0.0, %v902
  %904 = vmatprep.mubr.f32.mxu0 0.0
  %905 = vmatmul.mubr.f32.gmra.mxu0 %v28
  %v906 = vpop.f32.mrf.mxu0
  %v907 = vadd.f32 0.0, %v906
  %v908 = vpop.f32.mrf.mxu0
  %v909 = vadd.f32 0.0, %v908
  %910 = vdwg.mxu0
  %911 = vmatprep.subr.mxu0 0.0
  %912 = vmatpush1.msra.mxu0 0.0
  %913 = vmatprep.subr.mxu0 0.0
  %914 = vmatpush1.msra.mxu0 0.0
  %915 = vmatprep.subr.mxu0 0.0
  %916 = vmatpush1.msra.mxu0 0.0
  %917 = vmatprep.subr.mxu0 0.0
  %918 = vmatpush1.msra.mxu0 0.0
  %919 = vmatprep.subr.mxu0 0.0
  %920 = vmatpush1.msra.mxu0 0.0
  %921 = vmatprep.subr.mxu0 0.0
  %922 = vmatpush1.msra.mxu0 0.0
  %923 = vmatprep.subr.mxu0 0.0
  %924 = vmatpush1.msra.mxu0 0.0
  %925 = vmatprep.subr.mxu0 0.0
  %926 = vmatpush1.msra.mxu0 0.0
  %927 = vmatprep.subr.mxu0 0.0
  %928 = vmatpush1.msra.mxu0 0.0
  %929 = vmatprep.subr.mxu0 0.0
  %930 = vmatpush1.msra.mxu0 0.0
  %931 = vmatprep.subr.mxu0 0.0
  %932 = vmatpush1.msra.mxu0 0.0
  %933 = vmatprep.subr.mxu0 0.0
  %934 = vmatpush1.msra.mxu0 0.0
  %935 = vmatprep.subr.mxu0 0.0
  %936 = vmatpush1.msra.mxu0 0.0
  %937 = vmatprep.subr.mxu0 0.0
  %938 = vmatpush1.msra.mxu0 0.0
  %939 = vmatprep.subr.mxu0 0.0
  %940 = vmatpush1.msra.mxu0 0.0
  %941 = vmatprep.subr.mxu0 0.0
  %942 = vmatpush1.msra.mxu0 %v744
  %943 = vmatprep.subr.mxu0 0.0
  %944 = vmatpush2.msra.mxu0 0.0
  %945 = vmatprep.subr.mxu0 0.0
  %946 = vmatpush2.msra.mxu0 0.0
  %947 = vmatprep.subr.mxu0 0.0
  %948 = vmatpush2.msra.mxu0 0.0
  %949 = vmatprep.subr.mxu0 0.0
  %950 = vmatpush2.msra.mxu0 0.0
  %951 = vmatprep.subr.mxu0 0.0
  %952 = vmatpush2.msra.mxu0 0.0
  %953 = vmatprep.subr.mxu0 0.0
  %954 = vmatpush2.msra.mxu0 0.0
  %955 = vmatprep.subr.mxu0 0.0
  %956 = vmatpush2.msra.mxu0 0.0
  %957 = vmatprep.subr.mxu0 0.0
  %958 = vmatpush2.msra.mxu0 0.0
  %959 = vmatprep.subr.mxu0 0.0
  %960 = vmatpush2.msra.mxu0 0.0
  %961 = vmatprep.subr.mxu0 0.0
  %962 = vmatpush2.msra.mxu0 0.0
  %963 = vmatprep.subr.mxu0 0.0
  %964 = vmatpush2.msra.mxu0 0.0
  %965 = vmatprep.subr.mxu0 0.0
  %966 = vmatpush2.msra.mxu0 0.0
  %967 = vmatprep.subr.mxu0 0.0
  %968 = vmatpush2.msra.mxu0 0.0
  %969 = vmatprep.subr.mxu0 0.0
  %970 = vmatpush2.msra.mxu0 0.0
  %971 = vmatprep.subr.mxu0 0.0
  %972 = vmatpush2.msra.mxu0 0.0
  %973 = vmatprep.subr.mxu0 0.0
  %974 = vmatpush2.msra.mxu0 0.0
  %975 = vmatprep.mubr.f32.mxu0 0.0
  %976 = vmatmul.mubr.f32.gmra.mxu0 %v22
  %v977 = vpop.f32.mrf.mxu0
  %v978 = vadd.f32 0.0, %v977
  %v979 = vpop.f32.mrf.mxu0
  %980 = vmatprep.mubr.f32.mxu0 0.0
  %981 = vmatmul.mubr.f32.gmra.mxu0 %v25
  %v982 = vpop.f32.mrf.mxu0
  %v983 = vadd.f32 0.0, %v982
  %v984 = vpop.f32.mrf.mxu0
  %985 = vmatprep.mubr.f32.mxu0 0.0
  %986 = vmatmul.mubr.f32.gmra.mxu0 %v28
  %v987 = vpop.f32.mrf.mxu0
  %v988 = vadd.f32 0.0, %v987
  %v989 = vpop.f32.mrf.mxu0
  %990 = vdwg.mxu0
  %991 = vmatprep.subr.mxu0 %v736
  %992 = vmatpush1.msra.mxu0 %v735
  %993 = vmatprep.subr.mxu0 %v731
  %994 = vmatpush1.msra.mxu0 %v730
  %995 = vmatprep.subr.mxu0 %v726
  %996 = vmatpush1.msra.mxu0 %v725
  %997 = vmatprep.subr.mxu0 %v721
  %998 = vmatpush1.msra.mxu0 %v720
  %999 = vmatprep.subr.mxu0 %v716
  %1000 = vmatpush1.msra.mxu0 %v715
  %1001 = vmatprep.subr.mxu0 %v711
  %1002 = vmatpush1.msra.mxu0 %v710
  %1003 = vmatprep.subr.mxu0 %v706
  %1004 = vmatpush1.msra.mxu0 %v705
  %1005 = vmatprep.subr.mxu0 %v701
  %1006 = vmatpush1.msra.mxu0 %v700
  %1007 = vmatprep.subr.mxu0 %v696
  %1008 = vmatpush1.msra.mxu0 %v695
  %1009 = vmatprep.subr.mxu0 %v691
  %1010 = vmatpush1.msra.mxu0 %v690
  %1011 = vmatprep.subr.mxu0 %v686
  %1012 = vmatpush1.msra.mxu0 %v685
  %1013 = vmatprep.subr.mxu0 %v681
  %1014 = vmatpush1.msra.mxu0 %v680
  %1015 = vmatprep.subr.mxu0 %v676
  %1016 = vmatpush1.msra.mxu0 %v675
  %1017 = vmatprep.subr.mxu0 %v671
  %1018 = vmatpush1.msra.mxu0 %v670
  %1019 = vmatprep.subr.mxu0 %v666
  %1020 = vmatpush1.msra.mxu0 %v665
  %1021 = vmatprep.subr.mxu0 %v661
  %1022 = vmatpush1.msra.mxu0 %v660
  %1023 = vmatprep.subr.mxu0 0.0
  %1024 = vmatpush2.msra.mxu0 0.0
  %1025 = vmatprep.subr.mxu0 0.0
  %1026 = vmatpush2.msra.mxu0 0.0
  %1027 = vmatprep.subr.mxu0 0.0
  %1028 = vmatpush2.msra.mxu0 0.0
  %1029 = vmatprep.subr.mxu0 0.0
  %1030 = vmatpush2.msra.mxu0 0.0
  %1031 = vmatprep.subr.mxu0 0.0
  %1032 = vmatpush2.msra.mxu0 0.0
  %1033 = vmatprep.subr.mxu0 0.0
  %1034 = vmatpush2.msra.mxu0 0.0
  %1035 = vmatprep.subr.mxu0 0.0
  %1036 = vmatpush2.msra.mxu0 0.0
  %1037 = vmatprep.subr.mxu0 0.0
  %1038 = vmatpush2.msra.mxu0 0.0
  %1039 = vmatprep.subr.mxu0 0.0
  %1040 = vmatpush2.msra.mxu0 0.0
  %1041 = vmatprep.subr.mxu0 0.0
  %1042 = vmatpush2.msra.mxu0 0.0
  %1043 = vmatprep.subr.mxu0 0.0
  %1044 = vmatpush2.msra.mxu0 0.0
  %1045 = vmatprep.subr.mxu0 0.0
  %1046 = vmatpush2.msra.mxu0 0.0
  %1047 = vmatprep.subr.mxu0 0.0
  %1048 = vmatpush2.msra.mxu0 0.0
  %1049 = vmatprep.subr.mxu0 0.0
  %1050 = vmatpush2.msra.mxu0 0.0
  %1051 = vmatprep.subr.mxu0 0.0
  %1052 = vmatpush2.msra.mxu0 0.0
  %1053 = vmatprep.subr.mxu0 0.0
  %1054 = vmatpush2.msra.mxu0 0.0
  %1055 = vmatprep.mubr.f32.mxu0 0.0
  %1056 = vmatmul.mubr.f32.gmra.mxu0 %v657
  %v1057 = vpop.f32.mrf.mxu0
  %v1058 = vadd.f32 %v812, %v1057
  %v1059 = vpop.f32.mrf.mxu0
  %v1060 = vadd.f32 %v814, %v1059
  %1061 = vmatprep.mubr.f32.mxu0 0.0
  %1062 = vmatmul.mubr.f32.gmra.mxu0 %v658
  %v1063 = vpop.f32.mrf.mxu0
  %v1064 = vadd.f32 %v818, %v1063
  %v1065 = vpop.f32.mrf.mxu0
  %v1066 = vadd.f32 %v820, %v1065
  %1067 = vmatprep.mubr.f32.mxu0 0.0
  %1068 = vmatmul.mubr.f32.gmra.mxu0 %v659
  %v1069 = vpop.f32.mrf.mxu0
  %v1070 = vadd.f32 %v824, %v1069
  %v1071 = vpop.f32.mrf.mxu0
  %v1072 = vadd.f32 %v826, %v1071
  %1073 = vdwg.mxu0
  %1074 = vmatprep.subr.mxu0 %v738
  %1075 = vmatpush1.msra.mxu0 %v737
  %1076 = vmatprep.subr.mxu0 %v733
  %1077 = vmatpush1.msra.mxu0 %v732
  %1078 = vmatprep.subr.mxu0 %v728
  %1079 = vmatpush1.msra.mxu0 %v727
  %1080 = vmatprep.subr.mxu0 %v723
  %1081 = vmatpush1.msra.mxu0 %v722
  %1082 = vmatprep.subr.mxu0 %v718
  %1083 = vmatpush1.msra.mxu0 %v717
  %1084 = vmatprep.subr.mxu0 %v713
  %1085 = vmatpush1.msra.mxu0 %v712
  %1086 = vmatprep.subr.mxu0 %v708
  %1087 = vmatpush1.msra.mxu0 %v707
  %1088 = vmatprep.subr.mxu0 %v703
  %1089 = vmatpush1.msra.mxu0 %v702
  %1090 = vmatprep.subr.mxu0 %v698
  %1091 = vmatpush1.msra.mxu0 %v697
  %1092 = vmatprep.subr.mxu0 %v693
  %1093 = vmatpush1.msra.mxu0 %v692
  %1094 = vmatprep.subr.mxu0 %v688
  %1095 = vmatpush1.msra.mxu0 %v687
  %1096 = vmatprep.subr.mxu0 %v683
  %1097 = vmatpush1.msra.mxu0 %v682
  %1098 = vmatprep.subr.mxu0 %v678
  %1099 = vmatpush1.msra.mxu0 %v677
  %1100 = vmatprep.subr.mxu0 %v673
  %1101 = vmatpush1.msra.mxu0 %v672
  %1102 = vmatprep.subr.mxu0 %v668
  %1103 = vmatpush1.msra.mxu0 %v667
  %1104 = vmatprep.subr.mxu0 %v663
  %1105 = vmatpush1.msra.mxu0 %v662
  %1106 = vmatprep.subr.mxu0 0.0
  %1107 = vmatpush2.msra.mxu0 0.0
  %1108 = vmatprep.subr.mxu0 0.0
  %1109 = vmatpush2.msra.mxu0 0.0
  %1110 = vmatprep.subr.mxu0 0.0
  %1111 = vmatpush2.msra.mxu0 0.0
  %1112 = vmatprep.subr.mxu0 0.0
  %1113 = vmatpush2.msra.mxu0 0.0
  %1114 = vmatprep.subr.mxu0 0.0
  %1115 = vmatpush2.msra.mxu0 0.0
  %1116 = vmatprep.subr.mxu0 0.0
  %1117 = vmatpush2.msra.mxu0 0.0
  %1118 = vmatprep.subr.mxu0 0.0
  %1119 = vmatpush2.msra.mxu0 0.0
  %1120 = vmatprep.subr.mxu0 0.0
  %1121 = vmatpush2.msra.mxu0 0.0
  %1122 = vmatprep.subr.mxu0 0.0
  %1123 = vmatpush2.msra.mxu0 0.0
  %1124 = vmatprep.subr.mxu0 0.0
  %1125 = vmatpush2.msra.mxu0 0.0
  %1126 = vmatprep.subr.mxu0 0.0
  %1127 = vmatpush2.msra.mxu0 0.0
  %1128 = vmatprep.subr.mxu0 0.0
  %1129 = vmatpush2.msra.mxu0 0.0
  %1130 = vmatprep.subr.mxu0 0.0
  %1131 = vmatpush2.msra.mxu0 0.0
  %1132 = vmatprep.subr.mxu0 0.0
  %1133 = vmatpush2.msra.mxu0 0.0
  %1134 = vmatprep.subr.mxu0 0.0
  %1135 = vmatpush2.msra.mxu0 0.0
  %1136 = vmatprep.subr.mxu0 0.0
  %1137 = vmatpush2.msra.mxu0 0.0
  %1138 = vmatprep.mubr.f32.mxu0 0.0
  %1139 = vmatmul.mubr.f32.gmra.mxu0 %v657
  %v1140 = vpop.f32.mrf.mxu0
  %v1141 = vadd.f32 %v895, %v1140
  %v1142 = vpop.f32.mrf.mxu0
  %v1143 = vadd.f32 %v897, %v1142
  %1144 = vmatprep.mubr.f32.mxu0 0.0
  %1145 = vmatmul.mubr.f32.gmra.mxu0 %v658
  %v1146 = vpop.f32.mrf.mxu0
  %v1147 = vadd.f32 %v901, %v1146
  %v1148 = vpop.f32.mrf.mxu0
  %v1149 = vadd.f32 %v903, %v1148
  %1150 = vmatprep.mubr.f32.mxu0 0.0
  %1151 = vmatmul.mubr.f32.gmra.mxu0 %v659
  %v1152 = vpop.f32.mrf.mxu0
  %v1153 = vadd.f32 %v907, %v1152
  %v1154 = vpop.f32.mrf.mxu0
  %v1155 = vadd.f32 %v909, %v1154
  %1156 = vdwg.mxu0
  %1157 = vmatprep.subr.mxu0 0.0
  %1158 = vmatpush1.msra.mxu0 %v739
  %1159 = vmatprep.subr.mxu0 0.0
  %1160 = vmatpush1.msra.mxu0 %v734
  %1161 = vmatprep.subr.mxu0 0.0
  %1162 = vmatpush1.msra.mxu0 %v729
  %1163 = vmatprep.subr.mxu0 0.0
  %1164 = vmatpush1.msra.mxu0 %v724
  %1165 = vmatprep.subr.mxu0 0.0
  %1166 = vmatpush1.msra.mxu0 %v719
  %1167 = vmatprep.subr.mxu0 0.0
  %1168 = vmatpush1.msra.mxu0 %v714
  %1169 = vmatprep.subr.mxu0 0.0
  %1170 = vmatpush1.msra.mxu0 %v709
  %1171 = vmatprep.subr.mxu0 0.0
  %1172 = vmatpush1.msra.mxu0 %v704
  %1173 = vmatprep.subr.mxu0 0.0
  %1174 = vmatpush1.msra.mxu0 %v699
  %1175 = vmatprep.subr.mxu0 0.0
  %1176 = vmatpush1.msra.mxu0 %v694
  %1177 = vmatprep.subr.mxu0 0.0
  %1178 = vmatpush1.msra.mxu0 %v689
  %1179 = vmatprep.subr.mxu0 0.0
  %1180 = vmatpush1.msra.mxu0 %v684
  %1181 = vmatprep.subr.mxu0 0.0
  %1182 = vmatpush1.msra.mxu0 %v679
  %1183 = vmatprep.subr.mxu0 0.0
  %1184 = vmatpush1.msra.mxu0 %v674
  %1185 = vmatprep.subr.mxu0 0.0
  %1186 = vmatpush1.msra.mxu0 %v669
  %1187 = vmatprep.subr.mxu0 0.0
  %1188 = vmatpush1.msra.mxu0 %v664
  %1189 = vmatprep.subr.mxu0 0.0
  %1190 = vmatpush2.msra.mxu0 0.0
  %1191 = vmatprep.subr.mxu0 0.0
  %1192 = vmatpush2.msra.mxu0 0.0
  %1193 = vmatprep.subr.mxu0 0.0
  %1194 = vmatpush2.msra.mxu0 0.0
  %1195 = vmatprep.subr.mxu0 0.0
  %1196 = vmatpush2.msra.mxu0 0.0
  %1197 = vmatprep.subr.mxu0 0.0
  %1198 = vmatpush2.msra.mxu0 0.0
  %1199 = vmatprep.subr.mxu0 0.0
  %1200 = vmatpush2.msra.mxu0 0.0
  %1201 = vmatprep.subr.mxu0 0.0
  %1202 = vmatpush2.msra.mxu0 0.0
  %1203 = vmatprep.subr.mxu0 0.0
  %1204 = vmatpush2.msra.mxu0 0.0
  %1205 = vmatprep.subr.mxu0 0.0
  %1206 = vmatpush2.msra.mxu0 0.0
  %1207 = vmatprep.subr.mxu0 0.0
  %1208 = vmatpush2.msra.mxu0 0.0
  %1209 = vmatprep.subr.mxu0 0.0
  %1210 = vmatpush2.msra.mxu0 0.0
  %1211 = vmatprep.subr.mxu0 0.0
  %1212 = vmatpush2.msra.mxu0 0.0
  %1213 = vmatprep.subr.mxu0 0.0
  %1214 = vmatpush2.msra.mxu0 0.0
  %1215 = vmatprep.subr.mxu0 0.0
  %1216 = vmatpush2.msra.mxu0 0.0
  %1217 = vmatprep.subr.mxu0 0.0
  %1218 = vmatpush2.msra.mxu0 0.0
  %1219 = vmatprep.subr.mxu0 0.0
  %1220 = vmatpush2.msra.mxu0 0.0
  %1221 = vmatprep.mubr.f32.mxu0 0.0
  %1222 = vmatmul.mubr.f32.gmra.mxu0 %v657
  %v1223 = vpop.f32.mrf.mxu0
  %v1224 = vadd.f32 %v978, %v1223
  %v1225 = vpop.f32.mrf.mxu0
  %1226 = vmatprep.mubr.f32.mxu0 0.0
  %1227 = vmatmul.mubr.f32.gmra.mxu0 %v658
  %v1228 = vpop.f32.mrf.mxu0
  %v1229 = vadd.f32 %v983, %v1228
  %v1230 = vpop.f32.mrf.mxu0
  %1231 = vmatprep.mubr.f32.mxu0 0.0
  %1232 = vmatmul.mubr.f32.gmra.mxu0 %v659
  %v1233 = vpop.f32.mrf.mxu0
  %v1234 = vadd.f32 %v988, %v1233
  %v1235 = vpop.f32.mrf.mxu0
  %1236 = vdwg.mxu0
  %1237 = vmatprep.subr.mxu0 0.0
  %1238 = vmatpush1.msra.mxu0 0.0
  %1239 = vmatprep.subr.mxu0 0.0
  %1240 = vmatpush1.msra.mxu0 0.0
  %1241 = vmatprep.subr.mxu0 0.0
  %1242 = vmatpush1.msra.mxu0 0.0
  %1243 = vmatprep.subr.mxu0 0.0
  %1244 = vmatpush1.msra.mxu0 0.0
  %1245 = vmatprep.subr.mxu0 0.0
  %1246 = vmatpush1.msra.mxu0 0.0
  %1247 = vmatprep.subr.mxu0 0.0
  %1248 = vmatpush1.msra.mxu0 0.0
  %1249 = vmatprep.subr.mxu0 0.0
  %1250 = vmatpush1.msra.mxu0 0.0
  %1251 = vmatprep.subr.mxu0 0.0
  %1252 = vmatpush1.msra.mxu0 0.0
  %1253 = vmatprep.subr.mxu0 0.0
  %1254 = vmatpush1.msra.mxu0 0.0
  %1255 = vmatprep.subr.mxu0 0.0
  %1256 = vmatpush1.msra.mxu0 0.0
  %1257 = vmatprep.subr.mxu0 0.0
  %1258 = vmatpush1.msra.mxu0 0.0
  %1259 = vmatprep.subr.mxu0 0.0
  %1260 = vmatpush1.msra.mxu0 0.0
  %1261 = vmatprep.subr.mxu0 0.0
  %1262 = vmatpush1.msra.mxu0 0.0
  %1263 = vmatprep.subr.mxu0 0.0
  %1264 = vmatpush1.msra.mxu0 %v1070
  %1265 = vmatprep.subr.mxu0 0.0
  %1266 = vmatpush1.msra.mxu0 %v1064
  %1267 = vmatprep.subr.mxu0 0.0
  %1268 = vmatpush1.msra.mxu0 %v1058
  %1269 = vmatprep.subr.mxu0 0.0
  %1270 = vmatpush2.msra.mxu0 0.0
  %1271 = vmatprep.subr.mxu0 0.0
  %1272 = vmatpush2.msra.mxu0 0.0
  %1273 = vmatprep.subr.mxu0 0.0
  %1274 = vmatpush2.msra.mxu0 0.0
  %1275 = vmatprep.subr.mxu0 0.0
  %1276 = vmatpush2.msra.mxu0 0.0
  %1277 = vmatprep.subr.mxu0 0.0
  %1278 = vmatpush2.msra.mxu0 0.0
  %1279 = vmatprep.subr.mxu0 0.0
  %1280 = vmatpush2.msra.mxu0 0.0
  %1281 = vmatprep.subr.mxu0 0.0
  %1282 = vmatpush2.msra.mxu0 0.0
  %1283 = vmatprep.subr.mxu0 0.0
  %1284 = vmatpush2.msra.mxu0 0.0
  %1285 = vmatprep.subr.mxu0 0.0
  %1286 = vmatpush2.msra.mxu0 0.0
  %1287 = vmatprep.subr.mxu0 0.0
  %1288 = vmatpush2.msra.mxu0 0.0
  %1289 = vmatprep.subr.mxu0 0.0
  %1290 = vmatpush2.msra.mxu0 0.0
  %1291 = vmatprep.subr.mxu0 0.0
  %1292 = vmatpush2.msra.mxu0 0.0
  %1293 = vmatprep.subr.mxu0 0.0
  %1294 = vmatpush2.msra.mxu0 0.0
  %1295 = vmatprep.subr.mxu0 0.0
  %1296 = vmatpush2.msra.mxu0 0.0
  %1297 = vmatprep.subr.mxu0 0.0
  %1298 = vmatpush2.msra.mxu0 0.0
  %1299 = vmatprep.subr.mxu0 0.0
  %1300 = vmatpush2.msra.mxu0 0.0
  %1301 = vmatprep.mubr.f32.mxu0 0.0
  %1302 = vmatmul.mubr.f32.gmra.mxu0 %v281
  %v1303 = vpop.f32.mrf.mxu0
  %v1304 = vadd.f32 0.0, %v1303
  %v1305 = vpop.f32.mrf.mxu0
  %1306 = vmatprep.mubr.f32.mxu0 0.0
  %1307 = vmatmul.mubr.f32.gmra.mxu0 %v284
  %v1308 = vpop.f32.mrf.mxu0
  %v1309 = vadd.f32 0.0, %v1308
  %v1310 = vpop.f32.mrf.mxu0
  %1311 = vmatprep.mubr.f32.mxu0 0.0
  %1312 = vmatmul.mubr.f32.gmra.mxu0 %v287
  %v1313 = vpop.f32.mrf.mxu0
  %v1314 = vadd.f32 0.0, %v1313
  %v1315 = vpop.f32.mrf.mxu0
  %1316 = vdwg.mxu0
  %v1317 = vadd.f32 %v1224, %v1304
  %v1318 = vadd.f32 %v1229, %v1309
  %v1319 = vadd.f32 %v1234, %v1314
  %1320 = vmatprep.subr.mxu0 0.0
  %1321 = vmatpush1.msra.mxu0 0.0
  %1322 = vmatprep.subr.mxu0 0.0
  %1323 = vmatpush1.msra.mxu0 0.0
  %1324 = vmatprep.subr.mxu0 0.0
  %1325 = vmatpush1.msra.mxu0 0.0
  %1326 = vmatprep.subr.mxu0 0.0
  %1327 = vmatpush1.msra.mxu0 0.0
  %1328 = vmatprep.subr.mxu0 0.0
  %1329 = vmatpush1.msra.mxu0 0.0
  %1330 = vmatprep.subr.mxu0 0.0
  %1331 = vmatpush1.msra.mxu0 0.0
  %1332 = vmatprep.subr.mxu0 0.0
  %1333 = vmatpush1.msra.mxu0 0.0
  %1334 = vmatprep.subr.mxu0 0.0
  %1335 = vmatpush1.msra.mxu0 0.0
  %1336 = vmatprep.subr.mxu0 0.0
  %1337 = vmatpush1.msra.mxu0 0.0
  %1338 = vmatprep.subr.mxu0 0.0
  %1339 = vmatpush1.msra.mxu0 0.0
  %1340 = vmatprep.subr.mxu0 0.0
  %1341 = vmatpush1.msra.mxu0 0.0
  %1342 = vmatprep.subr.mxu0 0.0
  %1343 = vmatpush1.msra.mxu0 0.0
  %1344 = vmatprep.subr.mxu0 0.0
  %1345 = vmatpush1.msra.mxu0 0.0
  %1346 = vmatprep.subr.mxu0 0.0
  %1347 = vmatpush1.msra.mxu0 %v1072
  %1348 = vmatprep.subr.mxu0 0.0
  %1349 = vmatpush1.msra.mxu0 %v1066
  %1350 = vmatprep.subr.mxu0 0.0
  %1351 = vmatpush1.msra.mxu0 %v1060
  %1352 = vmatprep.subr.mxu0 0.0
  %1353 = vmatpush2.msra.mxu0 0.0
  %1354 = vmatprep.subr.mxu0 0.0
  %1355 = vmatpush2.msra.mxu0 0.0
  %1356 = vmatprep.subr.mxu0 0.0
  %1357 = vmatpush2.msra.mxu0 0.0
  %1358 = vmatprep.subr.mxu0 0.0
  %1359 = vmatpush2.msra.mxu0 0.0
  %1360 = vmatprep.subr.mxu0 0.0
  %1361 = vmatpush2.msra.mxu0 0.0
  %1362 = vmatprep.subr.mxu0 0.0
  %1363 = vmatpush2.msra.mxu0 0.0
  %1364 = vmatprep.subr.mxu0 0.0
  %1365 = vmatpush2.msra.mxu0 0.0
  %1366 = vmatprep.subr.mxu0 0.0
  %1367 = vmatpush2.msra.mxu0 0.0
  %1368 = vmatprep.subr.mxu0 0.0
  %1369 = vmatpush2.msra.mxu0 0.0
  %1370 = vmatprep.subr.mxu0 0.0
  %1371 = vmatpush2.msra.mxu0 0.0
  %1372 = vmatprep.subr.mxu0 0.0
  %1373 = vmatpush2.msra.mxu0 0.0
  %1374 = vmatprep.subr.mxu0 0.0
  %1375 = vmatpush2.msra.mxu0 0.0
  %1376 = vmatprep.subr.mxu0 0.0
  %1377 = vmatpush2.msra.mxu0 0.0
  %1378 = vmatprep.subr.mxu0 0.0
  %1379 = vmatpush2.msra.mxu0 0.0
  %1380 = vmatprep.subr.mxu0 0.0
  %1381 = vmatpush2.msra.mxu0 0.0
  %1382 = vmatprep.subr.mxu0 0.0
  %1383 = vmatpush2.msra.mxu0 0.0
  %1384 = vmatprep.mubr.f32.mxu0 0.0
  %1385 = vmatmul.mubr.f32.gmra.mxu0 %v376
  %v1386 = vpop.f32.mrf.mxu0
  %v1387 = vadd.f32 0.0, %v1386
  %v1388 = vpop.f32.mrf.mxu0
  %1389 = vmatprep.mubr.f32.mxu0 0.0
  %1390 = vmatmul.mubr.f32.gmra.mxu0 %v379
  %v1391 = vpop.f32.mrf.mxu0
  %v1392 = vadd.f32 0.0, %v1391
  %v1393 = vpop.f32.mrf.mxu0
  %1394 = vmatprep.mubr.f32.mxu0 0.0
  %1395 = vmatmul.mubr.f32.gmra.mxu0 %v382
  %v1396 = vpop.f32.mrf.mxu0
  %v1397 = vadd.f32 0.0, %v1396
  %v1398 = vpop.f32.mrf.mxu0
  %1399 = vdwg.mxu0
  %v1400 = vadd.f32 %v1317, %v1387
  %v1401 = vadd.f32 %v1318, %v1392
  %v1402 = vadd.f32 %v1319, %v1397
  %1403 = vmatprep.subr.mxu0 0.0
  %1404 = vmatpush1.msra.mxu0 0.0
  %1405 = vmatprep.subr.mxu0 0.0
  %1406 = vmatpush1.msra.mxu0 0.0
  %1407 = vmatprep.subr.mxu0 0.0
  %1408 = vmatpush1.msra.mxu0 0.0
  %1409 = vmatprep.subr.mxu0 0.0
  %1410 = vmatpush1.msra.mxu0 0.0
  %1411 = vmatprep.subr.mxu0 0.0
  %1412 = vmatpush1.msra.mxu0 0.0
  %1413 = vmatprep.subr.mxu0 0.0
  %1414 = vmatpush1.msra.mxu0 0.0
  %1415 = vmatprep.subr.mxu0 0.0
  %1416 = vmatpush1.msra.mxu0 0.0
  %1417 = vmatprep.subr.mxu0 0.0
  %1418 = vmatpush1.msra.mxu0 0.0
  %1419 = vmatprep.subr.mxu0 0.0
  %1420 = vmatpush1.msra.mxu0 0.0
  %1421 = vmatprep.subr.mxu0 0.0
  %1422 = vmatpush1.msra.mxu0 0.0
  %1423 = vmatprep.subr.mxu0 0.0
  %1424 = vmatpush1.msra.mxu0 0.0
  %1425 = vmatprep.subr.mxu0 0.0
  %1426 = vmatpush1.msra.mxu0 0.0
  %1427 = vmatprep.subr.mxu0 0.0
  %1428 = vmatpush1.msra.mxu0 0.0
  %1429 = vmatprep.subr.mxu0 0.0
  %1430 = vmatpush1.msra.mxu0 %v1153
  %1431 = vmatprep.subr.mxu0 0.0
  %1432 = vmatpush1.msra.mxu0 %v1147
  %1433 = vmatprep.subr.mxu0 0.0
  %1434 = vmatpush1.msra.mxu0 %v1141
  %1435 = vmatprep.subr.mxu0 0.0
  %1436 = vmatpush2.msra.mxu0 0.0
  %1437 = vmatprep.subr.mxu0 0.0
  %1438 = vmatpush2.msra.mxu0 0.0
  %1439 = vmatprep.subr.mxu0 0.0
  %1440 = vmatpush2.msra.mxu0 0.0
  %1441 = vmatprep.subr.mxu0 0.0
  %1442 = vmatpush2.msra.mxu0 0.0
  %1443 = vmatprep.subr.mxu0 0.0
  %1444 = vmatpush2.msra.mxu0 0.0
  %1445 = vmatprep.subr.mxu0 0.0
  %1446 = vmatpush2.msra.mxu0 0.0
  %1447 = vmatprep.subr.mxu0 0.0
  %1448 = vmatpush2.msra.mxu0 0.0
  %1449 = vmatprep.subr.mxu0 0.0
  %1450 = vmatpush2.msra.mxu0 0.0
  %1451 = vmatprep.subr.mxu0 0.0
  %1452 = vmatpush2.msra.mxu0 0.0
  %1453 = vmatprep.subr.mxu0 0.0
  %1454 = vmatpush2.msra.mxu0 0.0
  %1455 = vmatprep.subr.mxu0 0.0
  %1456 = vmatpush2.msra.mxu0 0.0
  %1457 = vmatprep.subr.mxu0 0.0
  %1458 = vmatpush2.msra.mxu0 0.0
  %1459 = vmatprep.subr.mxu0 0.0
  %1460 = vmatpush2.msra.mxu0 0.0
  %1461 = vmatprep.subr.mxu0 0.0
  %1462 = vmatpush2.msra.mxu0 0.0
  %1463 = vmatprep.subr.mxu0 0.0
  %1464 = vmatpush2.msra.mxu0 0.0
  %1465 = vmatprep.subr.mxu0 0.0
  %1466 = vmatpush2.msra.mxu0 0.0
  %1467 = vmatprep.mubr.f32.mxu0 0.0
  %1468 = vmatmul.mubr.f32.gmra.mxu0 %v471
  %v1469 = vpop.f32.mrf.mxu0
  %v1470 = vadd.f32 0.0, %v1469
  %v1471 = vpop.f32.mrf.mxu0
  %1472 = vmatprep.mubr.f32.mxu0 0.0
  %1473 = vmatmul.mubr.f32.gmra.mxu0 %v474
  %v1474 = vpop.f32.mrf.mxu0
  %v1475 = vadd.f32 0.0, %v1474
  %v1476 = vpop.f32.mrf.mxu0
  %1477 = vmatprep.mubr.f32.mxu0 0.0
  %1478 = vmatmul.mubr.f32.gmra.mxu0 %v477
  %v1479 = vpop.f32.mrf.mxu0
  %v1480 = vadd.f32 0.0, %v1479
  %v1481 = vpop.f32.mrf.mxu0
  %1482 = vdwg.mxu0
  %v1483 = vadd.f32 %v1400, %v1470
  %v1484 = vadd.f32 %v1401, %v1475
  %v1485 = vadd.f32 %v1402, %v1480
  %1486 = vmatprep.subr.mxu0 0.0
  %1487 = vmatpush1.msra.mxu0 0.0
  %1488 = vmatprep.subr.mxu0 0.0
  %1489 = vmatpush1.msra.mxu0 0.0
  %1490 = vmatprep.subr.mxu0 0.0
  %1491 = vmatpush1.msra.mxu0 0.0
  %1492 = vmatprep.subr.mxu0 0.0
  %1493 = vmatpush1.msra.mxu0 0.0
  %1494 = vmatprep.subr.mxu0 0.0
  %1495 = vmatpush1.msra.mxu0 0.0
  %1496 = vmatprep.subr.mxu0 0.0
  %1497 = vmatpush1.msra.mxu0 0.0
  %1498 = vmatprep.subr.mxu0 0.0
  %1499 = vmatpush1.msra.mxu0 0.0
  %1500 = vmatprep.subr.mxu0 0.0
  %1501 = vmatpush1.msra.mxu0 0.0
  %1502 = vmatprep.subr.mxu0 0.0
  %1503 = vmatpush1.msra.mxu0 0.0
  %1504 = vmatprep.subr.mxu0 0.0
  %1505 = vmatpush1.msra.mxu0 0.0
  %1506 = vmatprep.subr.mxu0 0.0
  %1507 = vmatpush1.msra.mxu0 0.0
  %1508 = vmatprep.subr.mxu0 0.0
  %1509 = vmatpush1.msra.mxu0 0.0
  %1510 = vmatprep.subr.mxu0 0.0
  %1511 = vmatpush1.msra.mxu0 0.0
  %1512 = vmatprep.subr.mxu0 0.0
  %1513 = vmatpush1.msra.mxu0 %v1155
  %1514 = vmatprep.subr.mxu0 0.0
  %1515 = vmatpush1.msra.mxu0 %v1149
  %1516 = vmatprep.subr.mxu0 0.0
  %1517 = vmatpush1.msra.mxu0 %v1143
  %1518 = vmatprep.subr.mxu0 0.0
  %1519 = vmatpush2.msra.mxu0 0.0
  %1520 = vmatprep.subr.mxu0 0.0
  %1521 = vmatpush2.msra.mxu0 0.0
  %1522 = vmatprep.subr.mxu0 0.0
  %1523 = vmatpush2.msra.mxu0 0.0
  %1524 = vmatprep.subr.mxu0 0.0
  %1525 = vmatpush2.msra.mxu0 0.0
  %1526 = vmatprep.subr.mxu0 0.0
  %1527 = vmatpush2.msra.mxu0 0.0
  %1528 = vmatprep.subr.mxu0 0.0
  %1529 = vmatpush2.msra.mxu0 0.0
  %1530 = vmatprep.subr.mxu0 0.0
  %1531 = vmatpush2.msra.mxu0 0.0
  %1532 = vmatprep.subr.mxu0 0.0
  %1533 = vmatpush2.msra.mxu0 0.0
  %1534 = vmatprep.subr.mxu0 0.0
  %1535 = vmatpush2.msra.mxu0 0.0
  %1536 = vmatprep.subr.mxu0 0.0
  %1537 = vmatpush2.msra.mxu0 0.0
  %1538 = vmatprep.subr.mxu0 0.0
  %1539 = vmatpush2.msra.mxu0 0.0
  %1540 = vmatprep.subr.mxu0 0.0
  %1541 = vmatpush2.msra.mxu0 0.0
  %1542 = vmatprep.subr.mxu0 0.0
  %1543 = vmatpush2.msra.mxu0 0.0
  %1544 = vmatprep.subr.mxu0 0.0
  %1545 = vmatpush2.msra.mxu0 0.0
  %1546 = vmatprep.subr.mxu0 0.0
  %1547 = vmatpush2.msra.mxu0 0.0
  %1548 = vmatprep.subr.mxu0 0.0
  %1549 = vmatpush2.msra.mxu0 0.0
  %1550 = vmatprep.mubr.f32.mxu0 0.0
  %1551 = vmatmul.mubr.f32.gmra.mxu0 %v566
  %v1552 = vpop.f32.mrf.mxu0
  %v1553 = vadd.f32 0.0, %v1552
  %v1554 = vpop.f32.mrf.mxu0
  %1555 = vmatprep.mubr.f32.mxu0 0.0
  %1556 = vmatmul.mubr.f32.gmra.mxu0 %v569
  %v1557 = vpop.f32.mrf.mxu0
  %v1558 = vadd.f32 0.0, %v1557
  %v1559 = vpop.f32.mrf.mxu0
  %1560 = vmatprep.mubr.f32.mxu0 0.0
  %1561 = vmatmul.mubr.f32.gmra.mxu0 %v572
  %v1562 = vpop.f32.mrf.mxu0
  %v1563 = vadd.f32 0.0, %v1562
  %v1564 = vpop.f32.mrf.mxu0
  %1565 = vdwg.mxu0
  %v1566 = vadd.f32 %v1483, %v1553
  %v1567 = vadd.f32 %v1484, %v1558
  %v1568 = vadd.f32 %v1485, %v1563
  %v1569 = vtanh.pop %v1566
  %v1570 = vtanh.pop %v1567
  %v1571 = vtanh.pop %v1568
  %v1572 = vld [vmem:[%s1 + $0x2d0] sm:$0xff]
  %v1573 = vld [vmem:[%s1 + $0x2d8] sm:$0xff]
  %v1574 = vld [vmem:[%s1 + $0x2f8] sm:$0xff]
  %v1575 = vld [vmem:[%s1 + $0x300] sm:$0xff]
  %v1576 = vld [vmem:[%s1 + $0x320] sm:$0xff]
  %v1577 = vld [vmem:[%s1 + $0x328] sm:$0xff]
  %v1578 = vld [vmem:[%s1 + $0x348] sm:$0xff]
  %v1579 = vld [vmem:[%s1 + $0x350] sm:$0xff]
  %v1580 = vld [vmem:[%s1 + $0x370] sm:$0xff]
  %v1581 = vld [vmem:[%s1 + $0x378] sm:$0xff]
  %v1582 = vld [vmem:[%s1 + $0x398] sm:$0xff]
  %v1583 = vld [vmem:[%s1 + $0x3a0] sm:$0xff]
  %v1584 = vld [vmem:[%s1 + $0x3c0] sm:$0xff]
  %v1585 = vld [vmem:[%s1 + $0x3c8] sm:$0xff]
  %v1586 = vld [vmem:[%s1 + $0x3e8] sm:$0xff]
  %v1587 = vld [vmem:[%s1 + $0x3f0] sm:$0xff]
  %v1588 = vld [vmem:[%s1 + $0x410] sm:$0xff]
  %v1589 = vld [vmem:[%s1 + $0x418] sm:$0xff]
  %v1590 = vld [vmem:[%s1 + $0x438] sm:$0xff]
  %v1591 = vld [vmem:[%s1 + $0x440] sm:$0xff]
  %v1592 = vld [vmem:[%s1 + $0x460] sm:$0xff]
  %v1593 = vld [vmem:[%s1 + $0x468] sm:$0xff]
  %v1594 = vld [vmem:[%s1 + $0x488] sm:$0xff]
  %v1595 = vld [vmem:[%s1 + $0x490] sm:$0xff]
  %v1596 = vld [vmem:[%s1 + $0x4b0] sm:$0xff]
  %v1597 = vld [vmem:[%s1 + $0x4b8] sm:$0xff]
  %v1598 = vld [vmem:[%s1 + $0x4d8] sm:$0xff]
  %v1599 = vld [vmem:[%s1 + $0x4e0] sm:$0xff]
  %v1600 = vld [vmem:[%s1 + $0x500] sm:$0xff]
  %v1601 = vld [vmem:[%s1 + $0x508] sm:$0xff]
  %v1602 = vld [vmem:[%s1 + $0x528] sm:$0xff]
  %v1603 = vld [vmem:[%s1 + $0x530] sm:$0xff]
  %v1604 = vld [vmem:[%s1 + $0x550] sm:$0xff]
  %v1605 = vld [vmem:[%s1 + $0x558] sm:$0xff]
  %1606 = vmatprep.subr.mxu0 0.0
  %1607 = vmatpush1.msra.mxu0 0.0
  %1608 = vmatprep.subr.mxu0 0.0
  %1609 = vmatpush1.msra.mxu0 0.0
  %1610 = vmatprep.subr.mxu0 0.0
  %1611 = vmatpush1.msra.mxu0 0.0
  %1612 = vmatprep.subr.mxu0 0.0
  %1613 = vmatpush1.msra.mxu0 0.0
  %1614 = vmatprep.subr.mxu0 0.0
  %1615 = vmatpush1.msra.mxu0 0.0
  %1616 = vmatprep.subr.mxu0 0.0
  %1617 = vmatpush1.msra.mxu0 0.0
  %1618 = vmatprep.subr.mxu0 0.0
  %1619 = vmatpush1.msra.mxu0 0.0
  %1620 = vmatprep.subr.mxu0 0.0
  %1621 = vmatpush1.msra.mxu0 0.0
  %1622 = vmatprep.subr.mxu0 0.0
  %1623 = vmatpush1.msra.mxu0 0.0
  %1624 = vmatprep.subr.mxu0 0.0
  %1625 = vmatpush1.msra.mxu0 0.0
  %1626 = vmatprep.subr.mxu0 0.0
  %1627 = vmatpush1.msra.mxu0 0.0
  %1628 = vmatprep.subr.mxu0 0.0
  %1629 = vmatpush1.msra.mxu0 0.0
  %1630 = vmatprep.subr.mxu0 0.0
  %1631 = vmatpush1.msra.mxu0 0.0
  %1632 = vmatprep.subr.mxu0 0.0
  %1633 = vmatpush1.msra.mxu0 0.0
  %1634 = vmatprep.subr.mxu0 0.0
  %1635 = vmatpush1.msra.mxu0 0.0
  %1636 = vmatprep.subr.mxu0 %v1605
  %1637 = vmatpush1.msra.mxu0 %v1604
  %1638 = vmatprep.subr.mxu0 0.0
  %1639 = vmatpush2.msra.mxu0 0.0
  %1640 = vmatprep.subr.mxu0 0.0
  %1641 = vmatpush2.msra.mxu0 0.0
  %1642 = vmatprep.subr.mxu0 0.0
  %1643 = vmatpush2.msra.mxu0 0.0
  %1644 = vmatprep.subr.mxu0 0.0
  %1645 = vmatpush2.msra.mxu0 0.0
  %1646 = vmatprep.subr.mxu0 0.0
  %1647 = vmatpush2.msra.mxu0 0.0
  %1648 = vmatprep.subr.mxu0 0.0
  %1649 = vmatpush2.msra.mxu0 0.0
  %1650 = vmatprep.subr.mxu0 0.0
  %1651 = vmatpush2.msra.mxu0 0.0
  %1652 = vmatprep.subr.mxu0 0.0
  %1653 = vmatpush2.msra.mxu0 0.0
  %1654 = vmatprep.subr.mxu0 0.0
  %1655 = vmatpush2.msra.mxu0 0.0
  %1656 = vmatprep.subr.mxu0 0.0
  %1657 = vmatpush2.msra.mxu0 0.0
  %1658 = vmatprep.subr.mxu0 0.0
  %1659 = vmatpush2.msra.mxu0 0.0
  %1660 = vmatprep.subr.mxu0 0.0
  %1661 = vmatpush2.msra.mxu0 0.0
  %1662 = vmatprep.subr.mxu0 0.0
  %1663 = vmatpush2.msra.mxu0 0.0
  %1664 = vmatprep.subr.mxu0 0.0
  %1665 = vmatpush2.msra.mxu0 0.0
  %1666 = vmatprep.subr.mxu0 0.0
  %1667 = vmatpush2.msra.mxu0 0.0
  %1668 = vmatprep.subr.mxu0 0.0
  %1669 = vmatpush2.msra.mxu0 0.0
  %1670 = vmatprep.mubr.f32.mxu0 0.0
  %1671 = vmatmul.mubr.f32.gmra.mxu0 %v22
  %v1672 = vpop.f32.mrf.mxu0
  %v1673 = vadd.f32 0.0, %v1672
  %v1674 = vpop.f32.mrf.mxu0
  %v1675 = vadd.f32 0.0, %v1674
  %1676 = vmatprep.mubr.f32.mxu0 0.0
  %1677 = vmatmul.mubr.f32.gmra.mxu0 %v25
  %v1678 = vpop.f32.mrf.mxu0
  %v1679 = vadd.f32 0.0, %v1678
  %v1680 = vpop.f32.mrf.mxu0
  %v1681 = vadd.f32 0.0, %v1680
  %1682 = vmatprep.mubr.f32.mxu0 0.0
  %1683 = vmatmul.mubr.f32.gmra.mxu0 %v28
  %v1684 = vpop.f32.mrf.mxu0
  %v1685 = vadd.f32 0.0, %v1684
  %v1686 = vpop.f32.mrf.mxu0
  %v1687 = vadd.f32 0.0, %v1686
  %1688 = vdwg.mxu0
  %1689 = vmatprep.subr.mxu0 %v1603
  %1690 = vmatpush1.msra.mxu0 %v1602
  %1691 = vmatprep.subr.mxu0 %v1601
  %1692 = vmatpush1.msra.mxu0 %v1600
  %1693 = vmatprep.subr.mxu0 %v1599
  %1694 = vmatpush1.msra.mxu0 %v1598
  %1695 = vmatprep.subr.mxu0 %v1597
  %1696 = vmatpush1.msra.mxu0 %v1596
  %1697 = vmatprep.subr.mxu0 %v1595
  %1698 = vmatpush1.msra.mxu0 %v1594
  %1699 = vmatprep.subr.mxu0 %v1593
  %1700 = vmatpush1.msra.mxu0 %v1592
  %1701 = vmatprep.subr.mxu0 %v1591
  %1702 = vmatpush1.msra.mxu0 %v1590
  %1703 = vmatprep.subr.mxu0 %v1589
  %1704 = vmatpush1.msra.mxu0 %v1588
  %1705 = vmatprep.subr.mxu0 %v1587
  %1706 = vmatpush1.msra.mxu0 %v1586
  %1707 = vmatprep.subr.mxu0 %v1585
  %1708 = vmatpush1.msra.mxu0 %v1584
  %1709 = vmatprep.subr.mxu0 %v1583
  %1710 = vmatpush1.msra.mxu0 %v1582
  %1711 = vmatprep.subr.mxu0 %v1581
  %1712 = vmatpush1.msra.mxu0 %v1580
  %1713 = vmatprep.subr.mxu0 %v1579
  %1714 = vmatpush1.msra.mxu0 %v1578
  %1715 = vmatprep.subr.mxu0 %v1577
  %1716 = vmatpush1.msra.mxu0 %v1576
  %1717 = vmatprep.subr.mxu0 %v1575
  %1718 = vmatpush1.msra.mxu0 %v1574
  %1719 = vmatprep.subr.mxu0 %v1573
  %1720 = vmatpush1.msra.mxu0 %v1572
  %1721 = vmatprep.subr.mxu0 0.0
  %1722 = vmatpush2.msra.mxu0 0.0
  %1723 = vmatprep.subr.mxu0 0.0
  %1724 = vmatpush2.msra.mxu0 0.0
  %1725 = vmatprep.subr.mxu0 0.0
  %1726 = vmatpush2.msra.mxu0 0.0
  %1727 = vmatprep.subr.mxu0 0.0
  %1728 = vmatpush2.msra.mxu0 0.0
  %1729 = vmatprep.subr.mxu0 0.0
  %1730 = vmatpush2.msra.mxu0 0.0
  %1731 = vmatprep.subr.mxu0 0.0
  %1732 = vmatpush2.msra.mxu0 0.0
  %1733 = vmatprep.subr.mxu0 0.0
  %1734 = vmatpush2.msra.mxu0 0.0
  %1735 = vmatprep.subr.mxu0 0.0
  %1736 = vmatpush2.msra.mxu0 0.0
  %1737 = vmatprep.subr.mxu0 0.0
  %1738 = vmatpush2.msra.mxu0 0.0
  %1739 = vmatprep.subr.mxu0 0.0
  %1740 = vmatpush2.msra.mxu0 0.0
  %1741 = vmatprep.subr.mxu0 0.0
  %1742 = vmatpush2.msra.mxu0 0.0
  %1743 = vmatprep.subr.mxu0 0.0
  %1744 = vmatpush2.msra.mxu0 0.0
  %1745 = vmatprep.subr.mxu0 0.0
  %1746 = vmatpush2.msra.mxu0 0.0
  %1747 = vmatprep.subr.mxu0 0.0
  %1748 = vmatpush2.msra.mxu0 0.0
  %1749 = vmatprep.subr.mxu0 0.0
  %1750 = vmatpush2.msra.mxu0 0.0
  %1751 = vmatprep.subr.mxu0 0.0
  %1752 = vmatpush2.msra.mxu0 0.0
  %1753 = vmatprep.mubr.f32.mxu0 0.0
  %1754 = vmatmul.mubr.f32.gmra.mxu0 %v1569
  %v1755 = vpop.f32.mrf.mxu0
  %v1756 = vadd.f32 %v1673, %v1755
  %v1757 = vpop.f32.mrf.mxu0
  %v1758 = vadd.f32 %v1675, %v1757
  %1759 = vmatprep.mubr.f32.mxu0 0.0
  %1760 = vmatmul.mubr.f32.gmra.mxu0 %v1570
  %v1761 = vpop.f32.mrf.mxu0
  %v1762 = vadd.f32 %v1679, %v1761
  %v1763 = vpop.f32.mrf.mxu0
  %v1764 = vadd.f32 %v1681, %v1763
  %1765 = vmatprep.mubr.f32.mxu0 0.0
  %1766 = vmatmul.mubr.f32.gmra.mxu0 %v1571
  %v1767 = vpop.f32.mrf.mxu0
  %v1768 = vadd.f32 %v1685, %v1767
  %v1769 = vpop.f32.mrf.mxu0
  %v1770 = vadd.f32 %v1687, %v1769
  %1771 = vdwg.mxu0
  %v1772 = vxor.u32 %v1756, 2147483648
  %v1773 = vxor.u32 %v1762, 2147483648
  %v1774 = vxor.u32 %v1768, 2147483648
  %v1775 = vmul.f32 %v1772, 1.442695
  %v1776 = vpow.pop %v1775
  %v1777 = vmul.f32 %v1773, 1.442695
  %v1778 = vpow.pop %v1777
  %v1779 = vmul.f32 %v1774, 1.442695
  %v1780 = vpow.pop %v1779
  %v1781 = vadd.f32 %v1776, 1.0
  %v1782 = vadd.f32 %v1778, 1.0
  %v1783 = vadd.f32 %v1780, 1.0
  %v1784 = vrcp.pop %v1781
  %v1785 = vmul.f32 1.0, %v1784
  %v1786 = vrcp.pop %v1782
  %v1787 = vmul.f32 1.0, %v1786
  %v1788 = vrcp.pop %v1783
  %v1789 = vmul.f32 1.0, %v1788
  %v1790 = vtanh.pop %v1758
  %v1791 = vtanh.pop %v1764
  %v1792 = vtanh.pop %v1770
  %v1793 = vmul.f32 %v1785, %v1790
  %v1794 = vmul.f32 %v1787, %v1791
  %v1795 = vmul.f32 %v1789, %v1792
  %v1797 = vsel %vm279, %v14, 0
  %1799 = vmatprep.subr.mxu0 0.0
  %1800 = vmatpush1.msra.mxu0 0.0
  %1801 = vmatprep.subr.mxu0 0.0
  %1802 = vmatpush1.msra.mxu0 0.0
  %1803 = vmatprep.subr.mxu0 0.0
  %1804 = vmatpush1.msra.mxu0 0.0
  %1805 = vmatprep.subr.mxu0 0.0
  %1806 = vmatpush1.msra.mxu0 0.0
  %1807 = vmatprep.subr.mxu0 0.0
  %1808 = vmatpush1.msra.mxu0 0.0
  %1809 = vmatprep.subr.mxu0 0.0
  %1810 = vmatpush1.msra.mxu0 0.0
  %1811 = vmatprep.subr.mxu0 0.0
  %1812 = vmatpush1.msra.mxu0 0.0
  %1813 = vmatprep.subr.mxu0 0.0
  %1814 = vmatpush1.msra.mxu0 0.0
  %1815 = vmatprep.subr.mxu0 0.0
  %1816 = vmatpush1.msra.mxu0 0.0
  %1817 = vmatprep.subr.mxu0 0.0
  %1818 = vmatpush1.msra.mxu0 0.0
  %1819 = vmatprep.subr.mxu0 0.0
  %1820 = vmatpush1.msra.mxu0 0.0
  %1821 = vmatprep.subr.mxu0 0.0
  %1822 = vmatpush1.msra.mxu0 0.0
  %1823 = vmatprep.subr.mxu0 0.0
  %1824 = vmatpush1.msra.mxu0 0.0
  %1825 = vmatprep.subr.mxu0 0.0
  %1826 = vmatpush1.msra.mxu0 %v1795
  %1827 = vmatprep.subr.mxu0 0.0
  %1828 = vmatpush1.msra.mxu0 %v1794
  %1829 = vmatprep.subr.mxu0 0.0
  %1830 = vmatpush1.msra.mxu0 %v1793
  %1831 = vmatprep.subr.mxu0 0.0
  %1832 = vmatpush2.msra.mxu0 0.0
  %1833 = vmatprep.subr.mxu0 0.0
  %1834 = vmatpush2.msra.mxu0 0.0
  %1835 = vmatprep.subr.mxu0 0.0
  %1836 = vmatpush2.msra.mxu0 0.0
  %1837 = vmatprep.subr.mxu0 0.0
  %1838 = vmatpush2.msra.mxu0 0.0
  %1839 = vmatprep.subr.mxu0 0.0
  %1840 = vmatpush2.msra.mxu0 0.0
  %1841 = vmatprep.subr.mxu0 0.0
  %1842 = vmatpush2.msra.mxu0 0.0
  %1843 = vmatprep.subr.mxu0 0.0
  %1844 = vmatpush2.msra.mxu0 0.0
  %1845 = vmatprep.subr.mxu0 0.0
  %1846 = vmatpush2.msra.mxu0 0.0
  %1847 = vmatprep.subr.mxu0 0.0
  %1848 = vmatpush2.msra.mxu0 0.0
  %1849 = vmatprep.subr.mxu0 0.0
  %1850 = vmatpush2.msra.mxu0 0.0
  %1851 = vmatprep.subr.mxu0 0.0
  %1852 = vmatpush2.msra.mxu0 0.0
  %1853 = vmatprep.subr.mxu0 0.0
  %1854 = vmatpush2.msra.mxu0 0.0
  %1855 = vmatprep.subr.mxu0 0.0
  %1856 = vmatpush2.msra.mxu0 0.0
  %1857 = vmatprep.subr.mxu0 0.0
  %1858 = vmatpush2.msra.mxu0 0.0
  %1859 = vmatprep.subr.mxu0 0.0
  %1860 = vmatpush2.msra.mxu0 0.0
  %1861 = vmatprep.subr.mxu0 0.0
  %1862 = vmatpush2.msra.mxu0 0.0
  %1863 = vmatprep.mubr.f32.mxu0 0.0
  %1864 = vmatmul.mubr.f32.gmra.mxu0 %v1797
  %v1865 = vpop.f32.mrf.mxu0
  %v1866 = vadd.f32 0.0, %v1865
  %v1867 = vpop.f32.mrf.mxu0
  %1868 = vdwg.mxu0
  %v1869 = vtanh.pop %v1866
  %v1870 = vld [vmem:[%s1 + $0x578] sm:$0xff]
  %v1871 = vld [vmem:[%s1 + $0x5a0] sm:$0xff]
  %v1872 = vld [vmem:[%s1 + $0x5c8] sm:$0xff]
  %v1873 = vld [vmem:[%s1 + $0x5f0] sm:$0xff]
  %v1874 = vld [vmem:[%s1 + $0x618] sm:$0xff]
  %v1875 = vld [vmem:[%s1 + $0x640] sm:$0xff]
  %v1876 = vld [vmem:[%s1 + $0x668] sm:$0xff]
  %v1877 = vld [vmem:[%s1 + $0x690] sm:$0xff]
  %v1878 = vld [vmem:[%s1 + $0x6b8] sm:$0xff]
  %v1879 = vld [vmem:[%s1 + $0x6e0] sm:$0xff]
  %v1880 = vld [vmem:[%s1 + $0x708] sm:$0xff]
  %v1881 = vld [vmem:[%s1 + $0x730] sm:$0xff]
  %v1882 = vld [vmem:[%s1 + $0x758] sm:$0xff]
  %v1883 = vld [vmem:[%s1 + $0x780] sm:$0xff]
  %v1884 = vld [vmem:[%s1 + $0x7a8] sm:$0xff]
  %v1885 = vld [vmem:[%s1 + $0x7d0] sm:$0xff]
  %v1886 = vld [vmem:[%s1 + $0x7f8] ss:$0 sm:$0xff]
  %1887 = vmatprep.subr.mxu0 0.0
  %1888 = vmatpush1.msra.mxu0 %v1885
  %1889 = vmatprep.subr.mxu0 0.0
  %1890 = vmatpush1.msra.mxu0 %v1884
  %1891 = vmatprep.subr.mxu0 0.0
  %1892 = vmatpush1.msra.mxu0 %v1883
  %1893 = vmatprep.subr.mxu0 0.0
  %1894 = vmatpush1.msra.mxu0 %v1882
  %1895 = vmatprep.subr.mxu0 0.0
  %1896 = vmatpush1.msra.mxu0 %v1881
  %1897 = vmatprep.subr.mxu0 0.0
  %1898 = vmatpush1.msra.mxu0 %v1880
  %1899 = vmatprep.subr.mxu0 0.0
  %1900 = vmatpush1.msra.mxu0 %v1879
  %1901 = vmatprep.subr.mxu0 0.0
  %1902 = vmatpush1.msra.mxu0 %v1878
  %1903 = vmatprep.subr.mxu0 0.0
  %1904 = vmatpush1.msra.mxu0 %v1877
  %1905 = vmatprep.subr.mxu0 0.0
  %1906 = vmatpush1.msra.mxu0 %v1876
  %1907 = vmatprep.subr.mxu0 0.0
  %1908 = vmatpush1.msra.mxu0 %v1875
  %1909 = vmatprep.subr.mxu0 0.0
  %1910 = vmatpush1.msra.mxu0 %v1874
  %1911 = vmatprep.subr.mxu0 0.0
  %1912 = vmatpush1.msra.mxu0 %v1873
  %1913 = vmatprep.subr.mxu0 0.0
  %1914 = vmatpush1.msra.mxu0 %v1872
  %1915 = vmatprep.subr.mxu0 0.0
  %1916 = vmatpush1.msra.mxu0 %v1871
  %1917 = vmatprep.subr.mxu0 0.0
  %1918 = vmatpush1.msra.mxu0 %v1870
  %1919 = vmatprep.subr.mxu0 0.0
  %1920 = vmatpush2.msra.mxu0 0.0
  %1921 = vmatprep.subr.mxu0 0.0
  %1922 = vmatpush2.msra.mxu0 0.0
  %1923 = vmatprep.subr.mxu0 0.0
  %1924 = vmatpush2.msra.mxu0 0.0
  %1925 = vmatprep.subr.mxu0 0.0
  %1926 = vmatpush2.msra.mxu0 0.0
  %1927 = vmatprep.subr.mxu0 0.0
  %1928 = vmatpush2.msra.mxu0 0.0
  %1929 = vmatprep.subr.mxu0 0.0
  %1930 = vmatpush2.msra.mxu0 0.0
  %1931 = vmatprep.subr.mxu0 0.0
  %1932 = vmatpush2.msra.mxu0 0.0
  %1933 = vmatprep.subr.mxu0 0.0
  %1934 = vmatpush2.msra.mxu0 0.0
  %1935 = vmatprep.subr.mxu0 0.0
  %1936 = vmatpush2.msra.mxu0 0.0
  %1937 = vmatprep.subr.mxu0 0.0
  %1938 = vmatpush2.msra.mxu0 0.0
  %1939 = vmatprep.subr.mxu0 0.0
  %1940 = vmatpush2.msra.mxu0 0.0
  %1941 = vmatprep.subr.mxu0 0.0
  %1942 = vmatpush2.msra.mxu0 0.0
  %1943 = vmatprep.subr.mxu0 0.0
  %1944 = vmatpush2.msra.mxu0 0.0
  %1945 = vmatprep.subr.mxu0 0.0
  %1946 = vmatpush2.msra.mxu0 0.0
  %1947 = vmatprep.subr.mxu0 0.0
  %1948 = vmatpush2.msra.mxu0 0.0
  %1949 = vmatprep.subr.mxu0 0.0
  %1950 = vmatpush2.msra.mxu0 0.0
  %1951 = vmatprep.mubr.f32.mxu0 0.0
  %1952 = vmatmul.mubr.f32.gmra.mxu0 %v1869
  %v1953 = vpop.f32.mrf.mxu0
  %v1954 = vadd.f32 %v1886, %v1953
  %v1955 = vpop.f32.mrf.mxu0
  %1956 = vdwg.mxu0
  %v1957 = vtanh.pop %v1954
  %v1958 = vld [vmem:[%s1 + $0x580] sm:$0xff]
  %v1959 = vld [vmem:[%s1 + $0x5a8] sm:$0xff]
  %v1960 = vld [vmem:[%s1 + $0x5d0] sm:$0xff]
  %v1961 = vld [vmem:[%s1 + $0x5f8] sm:$0xff]
  %v1962 = vld [vmem:[%s1 + $0x620] sm:$0xff]
  %v1963 = vld [vmem:[%s1 + $0x648] sm:$0xff]
  %v1964 = vld [vmem:[%s1 + $0x670] sm:$0xff]
  %v1965 = vld [vmem:[%s1 + $0x698] sm:$0xff]
  %v1966 = vld [vmem:[%s1 + $0x6c0] sm:$0xff]
  %v1967 = vld [vmem:[%s1 + $0x6e8] sm:$0xff]
  %v1968 = vld [vmem:[%s1 + $0x710] sm:$0xff]
  %v1969 = vld [vmem:[%s1 + $0x738] sm:$0xff]
  %v1970 = vld [vmem:[%s1 + $0x760] sm:$0xff]
  %v1971 = vld [vmem:[%s1 + $0x788] sm:$0xff]
  %v1972 = vld [vmem:[%s1 + $0x7b0] sm:$0xff]
  %v1973 = vld [vmem:[%s1 + $0x7d8] sm:$0xff]
  %v1974 = vld [vmem:[%s1 + $0x800] ss:$0 sm:$0xff]
  %1975 = vmatprep.subr.mxu0 0.0
  %1976 = vmatpush1.msra.mxu0 %v1973
  %1977 = vmatprep.subr.mxu0 0.0
  %1978 = vmatpush1.msra.mxu0 %v1972
  %1979 = vmatprep.subr.mxu0 0.0
  %1980 = vmatpush1.msra.mxu0 %v1971
  %1981 = vmatprep.subr.mxu0 0.0
  %1982 = vmatpush1.msra.mxu0 %v1970
  %1983 = vmatprep.subr.mxu0 0.0
  %1984 = vmatpush1.msra.mxu0 %v1969
  %1985 = vmatprep.subr.mxu0 0.0
  %1986 = vmatpush1.msra.mxu0 %v1968
  %1987 = vmatprep.subr.mxu0 0.0
  %1988 = vmatpush1.msra.mxu0 %v1967
  %1989 = vmatprep.subr.mxu0 0.0
  %1990 = vmatpush1.msra.mxu0 %v1966
  %1991 = vmatprep.subr.mxu0 0.0
  %1992 = vmatpush1.msra.mxu0 %v1965
  %1993 = vmatprep.subr.mxu0 0.0
  %1994 = vmatpush1.msra.mxu0 %v1964
  %1995 = vmatprep.subr.mxu0 0.0
  %1996 = vmatpush1.msra.mxu0 %v1963
  %1997 = vmatprep.subr.mxu0 0.0
  %1998 = vmatpush1.msra.mxu0 %v1962
  %1999 = vmatprep.subr.mxu0 0.0
  %2000 = vmatpush1.msra.mxu0 %v1961
  %2001 = vmatprep.subr.mxu0 0.0
  %2002 = vmatpush1.msra.mxu0 %v1960
  %2003 = vmatprep.subr.mxu0 0.0
  %2004 = vmatpush1.msra.mxu0 %v1959
  %2005 = vmatprep.subr.mxu0 0.0
  %2006 = vmatpush1.msra.mxu0 %v1958
  %2007 = vmatprep.subr.mxu0 0.0
  %2008 = vmatpush2.msra.mxu0 0.0
  %2009 = vmatprep.subr.mxu0 0.0
  %2010 = vmatpush2.msra.mxu0 0.0
  %2011 = vmatprep.subr.mxu0 0.0
  %2012 = vmatpush2.msra.mxu0 0.0
  %2013 = vmatprep.subr.mxu0 0.0
  %2014 = vmatpush2.msra.mxu0 0.0
  %2015 = vmatprep.subr.mxu0 0.0
  %2016 = vmatpush2.msra.mxu0 0.0
  %2017 = vmatprep.subr.mxu0 0.0
  %2018 = vmatpush2.msra.mxu0 0.0
  %2019 = vmatprep.subr.mxu0 0.0
  %2020 = vmatpush2.msra.mxu0 0.0
  %2021 = vmatprep.subr.mxu0 0.0
  %2022 = vmatpush2.msra.mxu0 0.0
  %2023 = vmatprep.subr.mxu0 0.0
  %2024 = vmatpush2.msra.mxu0 0.0
  %2025 = vmatprep.subr.mxu0 0.0
  %2026 = vmatpush2.msra.mxu0 0.0
  %2027 = vmatprep.subr.mxu0 0.0
  %2028 = vmatpush2.msra.mxu0 0.0
  %2029 = vmatprep.subr.mxu0 0.0
  %2030 = vmatpush2.msra.mxu0 0.0
  %2031 = vmatprep.subr.mxu0 0.0
  %2032 = vmatpush2.msra.mxu0 0.0
  %2033 = vmatprep.subr.mxu0 0.0
  %2034 = vmatpush2.msra.mxu0 0.0
  %2035 = vmatprep.subr.mxu0 0.0
  %2036 = vmatpush2.msra.mxu0 0.0
  %2037 = vmatprep.subr.mxu0 0.0
  %2038 = vmatpush2.msra.mxu0 0.0
  %2039 = vmatprep.mubr.f32.mxu0 0.0
  %2040 = vmatmul.mubr.f32.gmra.mxu0 %v1957
  %v2041 = vpop.f32.mrf.mxu0
  %v2042 = vadd.f32 %v1974, %v2041
  %v2043 = vpop.f32.mrf.mxu0
  %2044 = vdwg.mxu0
  %v2045 = vtanh.pop %v2042
  %v2046 = vld [vmem:[%s1 + $0x588] sm:$0xff]
  %v2047 = vld [vmem:[%s1 + $0x5b0] sm:$0xff]
  %v2048 = vld [vmem:[%s1 + $0x5d8] sm:$0xff]
  %v2049 = vld [vmem:[%s1 + $0x600] sm:$0xff]
  %v2050 = vld [vmem:[%s1 + $0x628] sm:$0xff]
  %v2051 = vld [vmem:[%s1 + $0x650] sm:$0xff]
  %v2052 = vld [vmem:[%s1 + $0x678] sm:$0xff]
  %v2053 = vld [vmem:[%s1 + $0x6a0] sm:$0xff]
  %v2054 = vld [vmem:[%s1 + $0x6c8] sm:$0xff]
  %v2055 = vld [vmem:[%s1 + $0x6f0] sm:$0xff]
  %v2056 = vld [vmem:[%s1 + $0x718] sm:$0xff]
  %v2057 = vld [vmem:[%s1 + $0x740] sm:$0xff]
  %v2058 = vld [vmem:[%s1 + $0x768] sm:$0xff]
  %v2059 = vld [vmem:[%s1 + $0x790] sm:$0xff]
  %v2060 = vld [vmem:[%s1 + $0x7b8] sm:$0xff]
  %v2061 = vld [vmem:[%s1 + $0x7e0] sm:$0xff]
  %v2062 = vld [vmem:[%s1 + $0x808] ss:$0 sm:$0xff]
  %2063 = vmatprep.subr.mxu0 0.0
  %2064 = vmatpush1.msra.mxu0 %v2061
  %2065 = vmatprep.subr.mxu0 0.0
  %2066 = vmatpush1.msra.mxu0 %v2060
  %2067 = vmatprep.subr.mxu0 0.0
  %2068 = vmatpush1.msra.mxu0 %v2059
  %2069 = vmatprep.subr.mxu0 0.0
  %2070 = vmatpush1.msra.mxu0 %v2058
  %2071 = vmatprep.subr.mxu0 0.0
  %2072 = vmatpush1.msra.mxu0 %v2057
  %2073 = vmatprep.subr.mxu0 0.0
  %2074 = vmatpush1.msra.mxu0 %v2056
  %2075 = vmatprep.subr.mxu0 0.0
  %2076 = vmatpush1.msra.mxu0 %v2055
  %2077 = vmatprep.subr.mxu0 0.0
  %2078 = vmatpush1.msra.mxu0 %v2054
  %2079 = vmatprep.subr.mxu0 0.0
  %2080 = vmatpush1.msra.mxu0 %v2053
  %2081 = vmatprep.subr.mxu0 0.0
  %2082 = vmatpush1.msra.mxu0 %v2052
  %2083 = vmatprep.subr.mxu0 0.0
  %2084 = vmatpush1.msra.mxu0 %v2051
  %2085 = vmatprep.subr.mxu0 0.0
  %2086 = vmatpush1.msra.mxu0 %v2050
  %2087 = vmatprep.subr.mxu0 0.0
  %2088 = vmatpush1.msra.mxu0 %v2049
  %2089 = vmatprep.subr.mxu0 0.0
  %2090 = vmatpush1.msra.mxu0 %v2048
  %2091 = vmatprep.subr.mxu0 0.0
  %2092 = vmatpush1.msra.mxu0 %v2047
  %2093 = vmatprep.subr.mxu0 0.0
  %2094 = vmatpush1.msra.mxu0 %v2046
  %2095 = vmatprep.subr.mxu0 0.0
  %2096 = vmatpush2.msra.mxu0 0.0
  %2097 = vmatprep.subr.mxu0 0.0
  %2098 = vmatpush2.msra.mxu0 0.0
  %2099 = vmatprep.subr.mxu0 0.0
  %2100 = vmatpush2.msra.mxu0 0.0
  %2101 = vmatprep.subr.mxu0 0.0
  %2102 = vmatpush2.msra.mxu0 0.0
  %2103 = vmatprep.subr.mxu0 0.0
  %2104 = vmatpush2.msra.mxu0 0.0
  %2105 = vmatprep.subr.mxu0 0.0
  %2106 = vmatpush2.msra.mxu0 0.0
  %2107 = vmatprep.subr.mxu0 0.0
  %2108 = vmatpush2.msra.mxu0 0.0
  %2109 = vmatprep.subr.mxu0 0.0
  %2110 = vmatpush2.msra.mxu0 0.0
  %2111 = vmatprep.subr.mxu0 0.0
  %2112 = vmatpush2.msra.mxu0 0.0
  %2113 = vmatprep.subr.mxu0 0.0
  %2114 = vmatpush2.msra.mxu0 0.0
  %2115 = vmatprep.subr.mxu0 0.0
  %2116 = vmatpush2.msra.mxu0 0.0
  %2117 = vmatprep.subr.mxu0 0.0
  %2118 = vmatpush2.msra.mxu0 0.0
  %2119 = vmatprep.subr.mxu0 0.0
  %2120 = vmatpush2.msra.mxu0 0.0
  %2121 = vmatprep.subr.mxu0 0.0
  %2122 = vmatpush2.msra.mxu0 0.0
  %2123 = vmatprep.subr.mxu0 0.0
  %2124 = vmatpush2.msra.mxu0 0.0
  %2125 = vmatprep.subr.mxu0 0.0
  %2126 = vmatpush2.msra.mxu0 0.0
  %2127 = vmatprep.mubr.f32.mxu0 0.0
  %2128 = vmatmul.mubr.f32.gmra.mxu0 %v2045
  %v2129 = vpop.f32.mrf.mxu0
  %v2130 = vadd.f32 %v2062, %v2129
  %v2131 = vpop.f32.mrf.mxu0
  %2132 = vdwg.mxu0
  %2133 = vst [vmem:[%s2] sm:$0xff] %v2130
  // Predicated region
  $region10: #{discriminator_forward.1} parent=0 // pred_check
    _
  $region11: #{discriminator_forward.1} parent=0 // pred_check_branch
    %2135 = sbr.rel (0) target = $region13
  $region12: #{discriminator_forward.1} parent=0 // pred_region
    _
  $region13: #{discriminator_forward.1} parent=0 // pred_fallthru
    _
  // Predicated region
  $region14: #{discriminator_forward.1} parent=0 // pred_check
    _
  $region15: #{discriminator_forward.1} parent=0 // pred_check_branch
    %2137 = sbr.rel (0) target = $region17
  $region16: #{discriminator_forward.1} parent=0 // pred_region
    _
  $region17: #{discriminator_forward.1} parent=0 // pred_fallthru
    _

</llo_original>
